<compile_context>
chip_gen: v7x
topology: tpu7x:2x2x1
jax: 0.10.0
libtpu: 0.0.40
codegen_flags: <defaults>
</compile_context>

<pallas_src>
import functools

import jax
import jax.numpy as jnp
from jax.experimental import pallas as pl
from jax.experimental.pallas import tpu as pltpu

BN_EPS = 1e-5


def _round_up(x, m):
    return (x + m - 1) // m * m


def fold_bn_into_conv(w, conv_bias, bn, eps=BN_EPS):
    """Fold inference-mode BN into conv weights (last axis = conv output channels)."""
    s = bn["g"] / jnp.sqrt(bn["v"] + eps)          # (Cout,)
    b = bn["b"] + s * (conv_bias - bn["m"])        # (Cout,)
    return w * s[None, :], b


# ---------------------------------------------------------------------------
# Fused kernel: one batch sample per grid step.
#   x_ref  : (H, W, Cin)            raw image (no padding)
#   exp_ref: (H+2, Wpad, Cexp)      VMEM scratch for the expanded activation
#   o_ref  : (Hout, Wout, Cout)
# ---------------------------------------------------------------------------
def _fused_kernel(x_ref, w1_ref, b1_ref, w2_ref, b2_ref, w3_ref, b3_ref,
                  o_ref, exp_ref, *, stride, add_residual):
    h, w, cin = x_ref.shape
    cexp = w1_ref.shape[1]
    hout, wout, cout = o_ref.shape

    # ---- stage 1: 1x1 expand + folded BN + ReLU6 (MXU, bf16 x bf16 -> f32) ----
    x = x_ref[...]                                    # (h, w, cin) f32
    xm = x.reshape(h * w, cin).astype(w1_ref.dtype)   # MXU operand (bf16 by default)
    y = jnp.dot(xm, w1_ref[...], preferred_element_type=jnp.float32)
    y = jnp.clip(y + b1_ref[...], 0.0, 6.0).reshape(h, w, cexp)

    # Expanded activation lives only in VMEM.  Zero-fill once, then write the valid
    # region at offset (1, 1): the 1-px halo stays zero, exactly PyTorch's zero
    # padding of the post-BN/ReLU6 tensor -> no masking / re-zeroing needed.
    exp_ref[...] = jnp.zeros_like(exp_ref)
    exp_ref[1:1 + h, 1:1 + w, :] = y

    # ---- stage 2: 3x3 depthwise + folded BN + ReLU6 (VPU, f32) ----------------
    # TODO(synk): on v6e/v7x keep this stage (and exp_ref) in bf16 with an f32
    #             accumulator; kept f32 so the same code is also right on v5e.
    w2 = w2_ref[...]                                  # (9, cexp)
    if stride == 1:
        acc = exp_ref[0:hout, 0:wout, :] * w2[0:1, :]          # init from tap (0,0)
        for tap in range(1, 9):
            di, dj = tap // 3, tap % 3
            acc = acc + exp_ref[di:di + hout, dj:dj + wout, :] * w2[tap:tap + 1, :]
    else:
        # TODO(synk): decimate columns at scratch-write time instead of strided reads.
        acc = exp_ref[pl.ds(0, hout, stride=stride),
                      pl.ds(0, wout, stride=stride), :] * w2[0:1, :]
        for tap in range(1, 9):
            di, dj = tap // 3, tap % 3
            acc = acc + exp_ref[pl.ds(di, hout, stride=stride),
                                pl.ds(dj, wout, stride=stride), :] * w2[tap:tap + 1, :]
    y2 = jnp.clip(acc + b2_ref[...], 0.0, 6.0)        # (hout, wout, cexp) f32

    # ---- stage 3: 1x1 project + folded BN (+ fused residual) (MXU) ------------
    z = jnp.dot(y2.reshape(hout * wout, cexp).astype(w3_ref.dtype), w3_ref[...],
                preferred_element_type=jnp.float32)
    z = z + b3_ref[...]
    if add_residual:                                  # stride==1 and Cin==Cout
        z = z + x.reshape(h * w, cin)
    o_ref[...] = z.reshape(hout, wout, cout).astype(o_ref.dtype)


# ---------------------------------------------------------------------------
# Wrapper: NCHW in/out, BN folding, one whole image per grid step.
# ---------------------------------------------------------------------------
def linear_bottleneck_forward(params, x_nchw, *, stride, in_channels, out_channels,
                              use_bf16=True):
    # TODO(synk): keep the surrounding network NHWC end-to-end to drop these two
    #             host-side layout transposes (each one is a full HBM pass).
    x = jnp.transpose(x_nchw, (0, 2, 3, 1)).astype(jnp.float32)     # NCHW -> NHWC
    n, h, w, cin = x.shape
    cexp = params["w1"].shape[1]
    cout = params["w3"].shape[1]
    hout = (h + 2 - 3) // stride + 1
    wout = (w + 2 - 3) // stride + 1

    mm_dtype = jnp.bfloat16 if use_bf16 else jnp.float32

    # Fold inference-mode BN into conv weights (scale -> weight, bias kept f32).
    w1f, b1f = fold_bn_into_conv(params["w1"], params["b1"], params["bn1"])
    w2f, b2f = fold_bn_into_conv(params["w2"], params["b2"], params["bn2"])
    w3f, b3f = fold_bn_into_conv(params["w3"], params["b3"], params["bn3"])
    w1m = w1f.astype(mm_dtype)               # (cin,  cexp) MXU operand
    w3m = w3f.astype(mm_dtype)               # (cexp, cout) MXU operand
    b1r = b1f.reshape(1, cexp)
    b2r = b2f.reshape(1, cexp)
    b3r = b3f.reshape(1, cout)

    add_residual = (stride == 1 and in_channels == out_channels)
    kernel = functools.partial(_fused_kernel, stride=stride, add_residual=add_residual)

    # One grid step == one whole image (no halo duplication, no row-tile gather).
    # Per-step VMEM: 2x input block + 2x output block + exp scratch + weights; for
    # real MobileNetV2 shapes this peaks at a few MiB, well under every
    # generation's scoped VMEM default (16/32/32 MiB on v5e/v6e/v7x).
    # TODO(synk): for very large images, add row tiling with a manually DMA'd halo
    #             window (memory_space=pl.ANY) instead of whole-image blocks.
    wpad = _round_up(w + 2, 8)               # sublane-aligned scratch width
    out = pl.pallas_call(
        kernel,
        out_shape=jax.ShapeDtypeStruct((n, hout, wout, cout), jnp.float32),
        grid_spec=pltpu.PrefetchScalarGridSpec(
            num_scalar_prefetch=0,
            grid=(n,),
            in_specs=[
                pl.BlockSpec((None, h, w, cin), lambda b: (b, 0, 0, 0)),  # x
                pl.BlockSpec((cin, cexp), lambda b: (0, 0)),              # w1 (resident)
                pl.BlockSpec((1, cexp), lambda b: (0, 0)),                # b1
                pl.BlockSpec((9, cexp), lambda b: (0, 0)),                # w2
                pl.BlockSpec((1, cexp), lambda b: (0, 0)),                # b2
                pl.BlockSpec((cexp, cout), lambda b: (0, 0)),             # w3
                pl.BlockSpec((1, cout), lambda b: (0, 0)),                # b3
            ],
            out_specs=pl.BlockSpec((None, hout, wout, cout), lambda b: (b, 0, 0, 0)),
            scratch_shapes=[pltpu.VMEM((h + 2, wpad, cexp), jnp.float32)],
        ),
        compiler_params=pltpu.CompilerParams(
            dimension_semantics=("parallel",)),      # batch axis -> 2 TCs on v7x
    )(x, w1m, b1r, w2f, b2r, w3m, b3r)

    return jnp.transpose(out, (0, 3, 1, 2))          # NHWC -> NCHW


# ---------------------------------------------------------------------------
# Parameter construction (deterministic, PyTorch layout).
# ---------------------------------------------------------------------------
def make_params(key, in_channels, out_channels, t=6):
    cexp = in_channels * t
    ks = jax.random.split(key, 18)

    def bn(k0, k1, k2, k3, c):
        return dict(
            g=0.5 + jax.random.uniform(k0, (c,), jnp.float32),      # gamma > 0
            b=0.1 * jax.random.normal(k1, (c,), jnp.float32),       # beta
            m=0.05 * jax.random.normal(k2, (c,), jnp.float32),      # running mean
            v=0.5 + jax.random.uniform(k3, (c,), jnp.float32),      # running var > 0
        )

    p = {
        # nn.Conv2d(in, in*t, 1): weight (Cexp, Cin, 1, 1), bias (Cexp,)
        "w1_pt": 0.2 * jax.random.normal(ks[0], (cexp, in_channels, 1, 1), jnp.float32),
        "b1": 0.05 * jax.random.normal(ks[1], (cexp,), jnp.float32),
        "bn1": bn(ks[2], ks[3], ks[4], ks[5], cexp),
        # nn.Conv2d(in*t, in*t, 3, stride, pad=1, groups=in*t): (Cexp, 1, 3, 3)
        "w2_pt": 0.2 * jax.random.normal(ks[6], (cexp, 1, 3, 3), jnp.float32),
        "b2": 0.05 * jax.random.normal(ks[7], (cexp,), jnp.float32),
        "bn2": bn(ks[8], ks[9], ks[10], ks[11], cexp),
        # nn.Conv2d(in*t, out, 1): (Cout, Cexp, 1, 1)
        "w3_pt": 0.2 * jax.random.normal(ks[12], (out_channels, cexp, 1, 1), jnp.float32),
        "b3": 0.05 * jax.random.normal(ks[13], (out_channels,), jnp.float32),
        "bn3": bn(ks[14], ks[15], ks[16], ks[17], out_channels),
    }
    # kernel-friendly layouts
    p["w1"] = p["w1_pt"].reshape(cexp, in_channels).T          # (Cin,  Cexp)
    p["w2"] = p["w2_pt"].reshape(cexp, 9).T                    # (9,    Cexp)
    p["w3"] = p["w3_pt"].reshape(out_channels, cexp).T         # (Cexp, Cout)
    return p


# ---------------------------------------------------------------------------
# Pure-JAX f32 reference (un-folded BN, PyTorch semantics) for correctness check.
# ---------------------------------------------------------------------------
def reference_forward(params, x_nchw, *, stride, in_channels, out_channels):
    x = jnp.transpose(x_nchw, (0, 2, 3, 1))

    def bnorm(z, bn):
        return bn["g"] * (z - bn["m"]) / jnp.sqrt(bn["v"] + BN_EPS) + bn["b"]

    z = jnp.einsum("nhwc,cd->nhwd", x, params["w1"]) + params["b1"]
    z = jnp.clip(bnorm(z, params["bn1"]), 0.0, 6.0)

    n, h, w, c = z.shape
    hout = (h + 2 - 3) // stride + 1
    wout = (w + 2 - 3) // stride + 1
    zp = jnp.pad(z, ((0, 0), (1, 1), (1, 1), (0, 0)))
    acc = jnp.zeros((n, hout, wout, c), jnp.float32)
    for di in range(3):
        for dj in range(3):
            acc = acc + zp[:, di:di + hout * stride:stride,
                              dj:dj + wout * stride:stride, :] * params["w2"][di * 3 + dj]
    z = acc + params["b2"]
    z = jnp.clip(bnorm(z, params["bn2"]), 0.0, 6.0)

    z = jnp.einsum("nhwc,cd->nhwd", z, params["w3"]) + params["b3"]
    z = bnorm(z, params["bn3"])
    if stride == 1 and in_channels == out_channels:
        z = z + x
    return jnp.transpose(z, (0, 3, 1, 2))


if __name__ == "__main__":
    in_channels, out_channels, stride, t = 4, 4, 1, 6
    key = jax.random.PRNGKey(0)
    kx, kp = jax.random.split(key)
    x = jax.random.normal(kx, (2, in_channels, 16, 16), jnp.float32)   # NCHW
    params = make_params(kp, in_channels, out_channels, t)

    ref = reference_forward(params, x, stride=stride,
                            in_channels=in_channels, out_channels=out_channels)

    # f32-matmul path: checks kernel structure (halo, taps, residual, BN folding).
    out_f32 = linear_bottleneck_forward(params, x, stride=stride,
                                        in_channels=in_channels,
                                        out_channels=out_channels, use_bf16=False)
    out_f32 = jax.block_until_ready(out_f32)
    assert out_f32.shape == (2, out_channels, 16, 16)
    assert jnp.allclose(out_f32, ref, atol=5e-2, rtol=5e-2), "f32 path mismatch"

    # bf16-MXU path (production config): tolerance bounded by bf16 operand rounding.
    out_bf16 = linear_bottleneck_forward(params, x, stride=stride,
                                         in_channels=in_channels,
                                         out_channels=out_channels, use_bf16=True)
    out_bf16 = jax.block_until_ready(out_bf16)
    assert out_bf16.shape == (2, out_channels, 16, 16)
    assert jnp.allclose(out_bf16, ref, atol=1.5e-1, rtol=5e-2), "bf16 path mismatch"

    print("KERNEL_OK")
</pallas_src>

<mosaic_0001>
module attributes {stable_mosaic.version = 11 : i64} {
  func.func @_fused_kernel(%arg0: i32, %arg1: memref<1x16x16x4xf32, #tpu.memory_space<vmem>>, %arg2: memref<4x24xf32, #tpu.memory_space<vmem>>, %arg3: memref<1x24xf32, #tpu.memory_space<vmem>>, %arg4: memref<9x24xf32, #tpu.memory_space<vmem>>, %arg5: memref<1x24xf32, #tpu.memory_space<vmem>>, %arg6: memref<24x4xf32, #tpu.memory_space<vmem>>, %arg7: memref<1x4xf32, #tpu.memory_space<vmem>>, %arg8: memref<1x16x16x4xf32, #tpu.memory_space<vmem>>, %arg9: memref<18x24x24xf32, #tpu.memory_space<vmem>>) attributes {dimension_semantics = [#tpu.dimension_semantics<parallel>], iteration_bounds = array<i64: 2>, scalar_prefetch = 0 : i64, scratch_operands = 1 : i64, tpu.core_type = #tpu.core_type<tc>, window_params = [{transform_indices = @transform_0, window_bounds = array<i64: 1, 16, 16, 4>}, {pipeline_mode = #tpu.pipeline_mode<synchronous>, transform_indices = @transform_1, window_bounds = array<i64: 4, 24>}, {pipeline_mode = #tpu.pipeline_mode<synchronous>, transform_indices = @transform_2, window_bounds = array<i64: 1, 24>}, {pipeline_mode = #tpu.pipeline_mode<synchronous>, transform_indices = @transform_3, window_bounds = array<i64: 9, 24>}, {pipeline_mode = #tpu.pipeline_mode<synchronous>, transform_indices = @transform_4, window_bounds = array<i64: 1, 24>}, {pipeline_mode = #tpu.pipeline_mode<synchronous>, transform_indices = @transform_5, window_bounds = array<i64: 24, 4>}, {pipeline_mode = #tpu.pipeline_mode<synchronous>, transform_indices = @transform_6, window_bounds = array<i64: 1, 4>}, {transform_indices = @transform_7, window_bounds = array<i64: 1, 16, 16, 4>}]} {
    %c0 = arith.constant 0 : index
    %c0_0 = arith.constant 0 : index
    %c0_1 = arith.constant 0 : index
    %c0_2 = arith.constant 0 : index
    %0 = vector.load %arg1[%c0, %c0_0, %c0_1, %c0_2] : memref<1x16x16x4xf32, #tpu.memory_space<vmem>>, vector<1x16x16x4xf32>
    %1 = vector.shape_cast %0 : vector<1x16x16x4xf32> to vector<16x16x4xf32>
    %2 = vector.shape_cast %1 : vector<16x16x4xf32> to vector<256x4xf32>
    %c0_3 = arith.constant 0 : index
    %c0_4 = arith.constant 0 : index
    %3 = vector.load %arg2[%c0_3, %c0_4] : memref<4x24xf32, #tpu.memory_space<vmem>>, vector<4x24xf32>
    %cst = arith.constant dense<0.000000e+00> : vector<256x24xf32>
    %4 = tpu.matmul %2, %3, %cst {dimension_numbers = #tpu.dot_dimension_numbers<[1], [0], [0], [1], [0, 0, 1, 1], [], []>} : vector<256x4xf32>, vector<4x24xf32>, vector<256x24xf32> -> vector<256x24xf32>
    %c0_5 = arith.constant 0 : index
    %c0_6 = arith.constant 0 : index
    %5 = vector.load %arg3[%c0_5, %c0_6] : memref<1x24xf32, #tpu.memory_space<vmem>>, vector<1x24xf32>
    %6 = vector.broadcast %5 : vector<1x24xf32> to vector<256x24xf32>
    %7 = arith.addf %4, %6 : vector<256x24xf32>
    %cst_7 = arith.constant 0.000000e+00 : f32
    %cst_8 = arith.constant 6.000000e+00 : f32
    %8 = vector.broadcast %cst_7 : f32 to vector<256x24xf32>
    %9 = arith.maximumf %8, %7 : vector<256x24xf32>
    %10 = vector.broadcast %cst_8 : f32 to vector<256x24xf32>
    %11 = arith.minimumf %10, %9 : vector<256x24xf32>
    %12 = vector.shape_cast %11 : vector<256x24xf32> to vector<16x16x24xf32>
    %cst_9 = arith.constant 0.000000e+00 : f32
    %13 = vector.broadcast %cst_9 : f32 to vector<18x24x24xf32>
    %c0_10 = arith.constant 0 : index
    %c0_11 = arith.constant 0 : index
    %c0_12 = arith.constant 0 : index
    %14 = vector.load %arg9[%c0_10, %c0_11, %c0_12] : memref<18x24x24xf32, #tpu.memory_space<vmem>>, vector<18x24x24xf32>
    tpu.vector_store %arg9[%c0_10, %c0_11, %c0_12], %13 {strides = array<i32>} : memref<18x24x24xf32, #tpu.memory_space<vmem>>, vector<18x24x24xf32>,
    %c1 = arith.constant 1 : index
    %c1_13 = arith.constant 1 : index
    %c0_14 = arith.constant 0 : index
    %15 = vector.load %arg9[%c1, %c1_13, %c0_14] : memref<18x24x24xf32, #tpu.memory_space<vmem>>, vector<16x16x24xf32>
    tpu.vector_store %arg9[%c1, %c1_13, %c0_14], %12 {strides = array<i32>} : memref<18x24x24xf32, #tpu.memory_space<vmem>>, vector<16x16x24xf32>,
    %c0_15 = arith.constant 0 : index
    %c0_16 = arith.constant 0 : index
    %16 = vector.load %arg4[%c0_15, %c0_16] : memref<9x24xf32, #tpu.memory_space<vmem>>, vector<9x24xf32>
    %c0_17 = arith.constant 0 : index
    %c0_18 = arith.constant 0 : index
    %c0_19 = arith.constant 0 : index
    %17 = vector.load %arg9[%c0_17, %c0_18, %c0_19] : memref<18x24x24xf32, #tpu.memory_space<vmem>>, vector<16x16x24xf32>
    %18 = vector.extract_strided_slice %16 {offsets = [0, 0], sizes = [1, 24], strides = [1, 1]} : vector<9x24xf32> to vector<1x24xf32>
    %19 = vector.shape_cast %18 : vector<1x24xf32> to vector<1x1x24xf32>
    %20 = vector.broadcast %19 : vector<1x1x24xf32> to vector<16x16x24xf32>
    %21 = arith.mulf %17, %20 : vector<16x16x24xf32>
    %c0_20 = arith.constant 0 : index
    %c1_21 = arith.constant 1 : index
    %c0_22 = arith.constant 0 : index
    %22 = vector.load %arg9[%c0_20, %c1_21, %c0_22] : memref<18x24x24xf32, #tpu.memory_space<vmem>>, vector<16x16x24xf32>
    %23 = vector.extract_strided_slice %16 {offsets = [1, 0], sizes = [1, 24], strides = [1, 1]} : vector<9x24xf32> to vector<1x24xf32>
    %24 = vector.shape_cast %23 : vector<1x24xf32> to vector<1x1x24xf32>
    %25 = vector.broadcast %24 : vector<1x1x24xf32> to vector<16x16x24xf32>
    %26 = arith.mulf %22, %25 : vector<16x16x24xf32>
    %27 = arith.addf %21, %26 : vector<16x16x24xf32>
    %c0_23 = arith.constant 0 : index
    %c2 = arith.constant 2 : index
    %c0_24 = arith.constant 0 : index
    %28 = vector.load %arg9[%c0_23, %c2, %c0_24] : memref<18x24x24xf32, #tpu.memory_space<vmem>>, vector<16x16x24xf32>
    %29 = vector.extract_strided_slice %16 {offsets = [2, 0], sizes = [1, 24], strides = [1, 1]} : vector<9x24xf32> to vector<1x24xf32>
    %30 = vector.shape_cast %29 : vector<1x24xf32> to vector<1x1x24xf32>
    %31 = vector.broadcast %30 : vector<1x1x24xf32> to vector<16x16x24xf32>
    %32 = arith.mulf %28, %31 : vector<16x16x24xf32>
    %33 = arith.addf %27, %32 : vector<16x16x24xf32>
    %c1_25 = arith.constant 1 : index
    %c0_26 = arith.constant 0 : index
    %c0_27 = arith.constant 0 : index
    %34 = vector.load %arg9[%c1_25, %c0_26, %c0_27] : memref<18x24x24xf32, #tpu.memory_space<vmem>>, vector<16x16x24xf32>
    %35 = vector.extract_strided_slice %16 {offsets = [3, 0], sizes = [1, 24], strides = [1, 1]} : vector<9x24xf32> to vector<1x24xf32>
    %36 = vector.shape_cast %35 : vector<1x24xf32> to vector<1x1x24xf32>
    %37 = vector.broadcast %36 : vector<1x1x24xf32> to vector<16x16x24xf32>
    %38 = arith.mulf %34, %37 : vector<16x16x24xf32>
    %39 = arith.addf %33, %38 : vector<16x16x24xf32>
    %c1_28 = arith.constant 1 : index
    %c1_29 = arith.constant 1 : index
    %c0_30 = arith.constant 0 : index
    %40 = vector.load %arg9[%c1_28, %c1_29, %c0_30] : memref<18x24x24xf32, #tpu.memory_space<vmem>>, vector<16x16x24xf32>
    %41 = vector.extract_strided_slice %16 {offsets = [4, 0], sizes = [1, 24], strides = [1, 1]} : vector<9x24xf32> to vector<1x24xf32>
    %42 = vector.shape_cast %41 : vector<1x24xf32> to vector<1x1x24xf32>
    %43 = vector.broadcast %42 : vector<1x1x24xf32> to vector<16x16x24xf32>
    %44 = arith.mulf %40, %43 : vector<16x16x24xf32>
    %45 = arith.addf %39, %44 : vector<16x16x24xf32>
    %c1_31 = arith.constant 1 : index
    %c2_32 = arith.constant 2 : index
    %c0_33 = arith.constant 0 : index
    %46 = vector.load %arg9[%c1_31, %c2_32, %c0_33] : memref<18x24x24xf32, #tpu.memory_space<vmem>>, vector<16x16x24xf32>
    %47 = vector.extract_strided_slice %16 {offsets = [5, 0], sizes = [1, 24], strides = [1, 1]} : vector<9x24xf32> to vector<1x24xf32>
    %48 = vector.shape_cast %47 : vector<1x24xf32> to vector<1x1x24xf32>
    %49 = vector.broadcast %48 : vector<1x1x24xf32> to vector<16x16x24xf32>
    %50 = arith.mulf %46, %49 : vector<16x16x24xf32>
    %51 = arith.addf %45, %50 : vector<16x16x24xf32>
    %c2_34 = arith.constant 2 : index
    %c0_35 = arith.constant 0 : index
    %c0_36 = arith.constant 0 : index
    %52 = vector.load %arg9[%c2_34, %c0_35, %c0_36] : memref<18x24x24xf32, #tpu.memory_space<vmem>>, vector<16x16x24xf32>
    %53 = vector.extract_strided_slice %16 {offsets = [6, 0], sizes = [1, 24], strides = [1, 1]} : vector<9x24xf32> to vector<1x24xf32>
    %54 = vector.shape_cast %53 : vector<1x24xf32> to vector<1x1x24xf32>
    %55 = vector.broadcast %54 : vector<1x1x24xf32> to vector<16x16x24xf32>
    %56 = arith.mulf %52, %55 : vector<16x16x24xf32>
    %57 = arith.addf %51, %56 : vector<16x16x24xf32>
    %c2_37 = arith.constant 2 : index
    %c1_38 = arith.constant 1 : index
    %c0_39 = arith.constant 0 : index
    %58 = vector.load %arg9[%c2_37, %c1_38, %c0_39] : memref<18x24x24xf32, #tpu.memory_space<vmem>>, vector<16x16x24xf32>
    %59 = vector.extract_strided_slice %16 {offsets = [7, 0], sizes = [1, 24], strides = [1, 1]} : vector<9x24xf32> to vector<1x24xf32>
    %60 = vector.shape_cast %59 : vector<1x24xf32> to vector<1x1x24xf32>
    %61 = vector.broadcast %60 : vector<1x1x24xf32> to vector<16x16x24xf32>
    %62 = arith.mulf %58, %61 : vector<16x16x24xf32>
    %63 = arith.addf %57, %62 : vector<16x16x24xf32>
    %c2_40 = arith.constant 2 : index
    %c2_41 = arith.constant 2 : index
    %c0_42 = arith.constant 0 : index
    %64 = vector.load %arg9[%c2_40, %c2_41, %c0_42] : memref<18x24x24xf32, #tpu.memory_space<vmem>>, vector<16x16x24xf32>
    %65 = vector.extract_strided_slice %16 {offsets = [8, 0], sizes = [1, 24], strides = [1, 1]} : vector<9x24xf32> to vector<1x24xf32>
    %66 = vector.shape_cast %65 : vector<1x24xf32> to vector<1x1x24xf32>
    %67 = vector.broadcast %66 : vector<1x1x24xf32> to vector<16x16x24xf32>
    %68 = arith.mulf %64, %67 : vector<16x16x24xf32>
    %69 = arith.addf %63, %68 : vector<16x16x24xf32>
    %c0_43 = arith.constant 0 : index
    %c0_44 = arith.constant 0 : index
    %70 = vector.load %arg5[%c0_43, %c0_44] : memref<1x24xf32, #tpu.memory_space<vmem>>, vector<1x24xf32>
    %71 = vector.shape_cast %70 : vector<1x24xf32> to vector<1x1x24xf32>
    %72 = vector.broadcast %71 : vector<1x1x24xf32> to vector<16x16x24xf32>
    %73 = arith.addf %69, %72 : vector<16x16x24xf32>
    %cst_45 = arith.constant 0.000000e+00 : f32
    %cst_46 = arith.constant 6.000000e+00 : f32
    %74 = vector.broadcast %cst_45 : f32 to vector<16x16x24xf32>
    %75 = arith.maximumf %74, %73 : vector<16x16x24xf32>
    %76 = vector.broadcast %cst_46 : f32 to vector<16x16x24xf32>
    %77 = arith.minimumf %76, %75 : vector<16x16x24xf32>
    %78 = vector.shape_cast %77 : vector<16x16x24xf32> to vector<256x24xf32>
    %c0_47 = arith.constant 0 : index
    %c0_48 = arith.constant 0 : index
    %79 = vector.load %arg6[%c0_47, %c0_48] : memref<24x4xf32, #tpu.memory_space<vmem>>, vector<24x4xf32>
    %cst_49 = arith.constant dense<0.000000e+00> : vector<256x4xf32>
    %80 = tpu.matmul %78, %79, %cst_49 {dimension_numbers = #tpu.dot_dimension_numbers<[1], [0], [0], [1], [0, 0, 1, 1], [], []>} : vector<256x24xf32>, vector<24x4xf32>, vector<256x4xf32> -> vector<256x4xf32>
    %c0_50 = arith.constant 0 : index
    %c0_51 = arith.constant 0 : index
    %81 = vector.load %arg7[%c0_50, %c0_51] : memref<1x4xf32, #tpu.memory_space<vmem>>, vector<1x4xf32>
    %82 = vector.broadcast %81 : vector<1x4xf32> to vector<256x4xf32>
    %83 = arith.addf %80, %82 : vector<256x4xf32>
    %84 = vector.shape_cast %1 : vector<16x16x4xf32> to vector<256x4xf32>
    %85 = arith.addf %83, %84 : vector<256x4xf32>
    %86 = vector.shape_cast %85 : vector<256x4xf32> to vector<16x16x4xf32>
    %c0_52 = arith.constant 0 : index
    %c0_53 = arith.constant 0 : index
    %c0_54 = arith.constant 0 : index
    %c0_55 = arith.constant 0 : index
    %87 = vector.load %arg8[%c0_52, %c0_53, %c0_54, %c0_55] : memref<1x16x16x4xf32, #tpu.memory_space<vmem>>, vector<1x16x16x4xf32>
    %88 = vector.shape_cast %87 : vector<1x16x16x4xf32> to vector<16x16x4xf32>
    %89 = vector.shape_cast %86 : vector<16x16x4xf32> to vector<1x16x16x4xf32>
    tpu.vector_store %arg8[%c0_52, %c0_53, %c0_54, %c0_55], %89 {strides = array<i32>} : memref<1x16x16x4xf32, #tpu.memory_space<vmem>>, vector<1x16x16x4xf32>,
    return
  }
  func.func @transform_0(%arg0: i32) -> (i32, i32, i32, i32) {
    %c0_i32 = arith.constant 0 : i32
    %c0_i32_0 = arith.constant 0 : i32
    %c0_i32_1 = arith.constant 0 : i32
    %c0_i32_2 = arith.constant 0 : i32
    return %arg0, %c0_i32, %c0_i32_0, %c0_i32_1 : i32, i32, i32, i32
  }
  func.func @transform_1(%arg0: i32) -> (i32, i32) {
    %c0_i32 = arith.constant 0 : i32
    %c0_i32_0 = arith.constant 0 : i32
    %c0_i32_1 = arith.constant 0 : i32
    return %c0_i32, %c0_i32_0 : i32, i32
  }
  func.func @transform_2(%arg0: i32) -> (i32, i32) {
    %c0_i32 = arith.constant 0 : i32
    %c0_i32_0 = arith.constant 0 : i32
    %c0_i32_1 = arith.constant 0 : i32
    return %c0_i32, %c0_i32_0 : i32, i32
  }
  func.func @transform_3(%arg0: i32) -> (i32, i32) {
    %c0_i32 = arith.constant 0 : i32
    %c0_i32_0 = arith.constant 0 : i32
    %c0_i32_1 = arith.constant 0 : i32
    return %c0_i32, %c0_i32_0 : i32, i32
  }
  func.func @transform_4(%arg0: i32) -> (i32, i32) {
    %c0_i32 = arith.constant 0 : i32
    %c0_i32_0 = arith.constant 0 : i32
    %c0_i32_1 = arith.constant 0 : i32
    return %c0_i32, %c0_i32_0 : i32, i32
  }
  func.func @transform_5(%arg0: i32) -> (i32, i32) {
    %c0_i32 = arith.constant 0 : i32
    %c0_i32_0 = arith.constant 0 : i32
    %c0_i32_1 = arith.constant 0 : i32
    return %c0_i32, %c0_i32_0 : i32, i32
  }
  func.func @transform_6(%arg0: i32) -> (i32, i32) {
    %c0_i32 = arith.constant 0 : i32
    %c0_i32_0 = arith.constant 0 : i32
    %c0_i32_1 = arith.constant 0 : i32
    return %c0_i32, %c0_i32_0 : i32, i32
  }
  func.func @transform_7(%arg0: i32) -> (i32, i32, i32, i32) {
    %c0_i32 = arith.constant 0 : i32
    %c0_i32_0 = arith.constant 0 : i32
    %c0_i32_1 = arith.constant 0 : i32
    %c0_i32_2 = arith.constant 0 : i32
    return %arg0, %c0_i32, %c0_i32_0, %c0_i32_1 : i32, i32, i32, i32
  }
}

</mosaic_0001>

<llo_original>
// kernel: tpu_custom_call.1
$region0: #{tpu_custom_call.1}
  #allocation0 [shape = 'u32[]', space=smem, size = 0x4, offset = 0x4, fixed_abs, tag = 'smem constant byte address 0x4 - core index']
  #allocation1 [shape = 'u32[144,128]{1,0:T(1,128)}', space=vmem, size = 0x12000, scoped, tag = 'internal scratch']
  #allocation2 [shape = 'f32[18,24,24]{2,1,0:T(8,128)}', space=vmem, size = 0x36000, scoped, tag = 'scratch operand']
  %s0 = inlined_call_operand.vmem [shape: f32[2,16,16,4], index: 0, kind: input, shape index: {}]
  %s1 = inlined_call_operand.vmem [shape: f32[4,24], index: 1, kind: input, shape index: {}]
  %s2 = inlined_call_operand.vmem [shape: f32[1,24], index: 2, kind: input, shape index: {}]
  %s3 = inlined_call_operand.vmem [shape: f32[9,24], index: 3, kind: input, shape index: {}]
  %s4 = inlined_call_operand.vmem [shape: f32[1,24], index: 4, kind: input, shape index: {}]
  %s5 = inlined_call_operand.vmem [shape: f32[24,4], index: 5, kind: input, shape index: {}]
  %s6 = inlined_call_operand.vmem [shape: f32[1,4], index: 6, kind: input, shape index: {}]
  %s7 = inlined_call_operand.vmem [shape: f32[2,16,16,4], index: 7, kind: output, shape index: {}]
  %s8 = sld [smem:[#allocation0]]
  $region61: #{tpu_custom_call.1} parent=0
    _
  %s10 = ssub.s32 1, %s8
  %s11 = scalar_select 0, %s10, %s8
  loop: start=0, step=1, limit=4
  $region2: #{tpu_custom_call.1} parent=0 // loop_pre_header
    _
  $region3: #{tpu_custom_call.1} parent=0 // loop_header
    %s13 = sphi 0, %s17
    %p14 = scmp.ge.s32.totalorder %s13, 4
    %s23 = sphi 0, %s25
    %s26 = sphi 0, %s23
    %s27 = sphi 0, %s26
    %s43 = sphi 0, %s27
    %s47 = sphi 0, %s47
    %s49 = sphi 0, %s47
    %s50 = sphi 0, %s49
    %s64 = sphi 0, %s50
    %s68 = sphi 0, %s68
    %s70 = sphi 0, %s68
    %s71 = sphi 0, %s70
    %s85 = sphi 0, %s71
    %s89 = sphi 0, %s89
    %s91 = sphi 0, %s89
    %s92 = sphi 0, %s91
    %s106 = sphi 0, %s92
    %s110 = sphi 0, %s110
    %s112 = sphi 0, %s110
    %s113 = sphi 0, %s112
    %s127 = sphi 0, %s113
    %s131 = sphi 0, %s131
    %s133 = sphi 0, %s131
    %s134 = sphi 0, %s133
    %s148 = sphi 0, %s134
    %s152 = sphi 0, %s152
    %s154 = sphi 0, %s152
    %s155 = sphi 0, %s154
    %s169 = sphi 0, %s155
    %s175 = sphi 0, %s177
    %s178 = sphi 0, %s175
    %s179 = sphi 0, %s178
    %s195 = sphi 0, %s179
  $region4: #{tpu_custom_call.1} parent=0 // loop_header_branch
    %16 = sbr.rel (%p14) target = $region8
  $region5: #{tpu_custom_call.1} parent=0 // loop_body
    %s18 = ssub.s32 %s13, 1
    %s19 = ssub.s32 %s13, 2
    %s20 = sadd.s32 %s13, 1
    %s21 = ssub.s32 %s13, %s20
    %p22 = scmp.eq.s32.totalorder %s21, 0
    %s24 = sadd.s32 %s23, 1
    %s25 = scalar_select %p22, %s23, %s24
    %p28 = pneg %p22
    %p29 = scmp.eq.s32.totalorder %s13, 1
    %p30 = por %p28, %p29
    %p31 = scmp.ne.s32.totalorder %s23, %s26
    %p32 = scmp.eq.s32.totalorder %s13, 0
    %p33 = por %p31, %p32
    %p34 = scmp.ne.s32.totalorder %s23, %s26
    %p35 = scmp.eq.s32.totalorder %s18, 1
    %p36 = por %p34, %p35
    %p37 = scmp.ne.s32.totalorder %s26, %s27
    %p38 = scmp.eq.s32.totalorder %s18, 0
    %p39 = por %p37, %p38
    %p40 = scmp.ne.s32.totalorder %s26, %s27
    %p41 = scmp.eq.s32.totalorder %s19, 1
    %p42 = por %p40, %p41
    %p44 = scmp.ne.s32.totalorder %s27, %s43
    %p45 = scmp.eq.s32.totalorder %s19, 0
    %p46 = por %p44, %p45
    %s48 = sadd.s32 %s47, 1
    %p51 = scmp.eq.s32.totalorder %s13, 1
    %p52 = scmp.ne.s32.totalorder %s47, %s49
    %p53 = scmp.eq.s32.totalorder %s13, 0
    %p54 = por %p52, %p53
    %p55 = scmp.ne.s32.totalorder %s47, %s49
    %p56 = scmp.eq.s32.totalorder %s18, 1
    %p57 = por %p55, %p56
    %p58 = scmp.ne.s32.totalorder %s49, %s50
    %p59 = scmp.eq.s32.totalorder %s18, 0
    %p60 = por %p58, %p59
    %p61 = scmp.ne.s32.totalorder %s49, %s50
    %p62 = scmp.eq.s32.totalorder %s19, 1
    %p63 = por %p61, %p62
    %p65 = scmp.ne.s32.totalorder %s50, %s64
    %p66 = scmp.eq.s32.totalorder %s19, 0
    %p67 = por %p65, %p66
    %s69 = sadd.s32 %s68, 1
    %p72 = scmp.eq.s32.totalorder %s13, 1
    %p73 = scmp.ne.s32.totalorder %s68, %s70
    %p74 = scmp.eq.s32.totalorder %s13, 0
    %p75 = por %p73, %p74
    %p76 = scmp.ne.s32.totalorder %s68, %s70
    %p77 = scmp.eq.s32.totalorder %s18, 1
    %p78 = por %p76, %p77
    %p79 = scmp.ne.s32.totalorder %s70, %s71
    %p80 = scmp.eq.s32.totalorder %s18, 0
    %p81 = por %p79, %p80
    %p82 = scmp.ne.s32.totalorder %s70, %s71
    %p83 = scmp.eq.s32.totalorder %s19, 1
    %p84 = por %p82, %p83
    %p86 = scmp.ne.s32.totalorder %s71, %s85
    %p87 = scmp.eq.s32.totalorder %s19, 0
    %p88 = por %p86, %p87
    %s90 = sadd.s32 %s89, 1
    %p93 = scmp.eq.s32.totalorder %s13, 1
    %p94 = scmp.ne.s32.totalorder %s89, %s91
    %p95 = scmp.eq.s32.totalorder %s13, 0
    %p96 = por %p94, %p95
    %p97 = scmp.ne.s32.totalorder %s89, %s91
    %p98 = scmp.eq.s32.totalorder %s18, 1
    %p99 = por %p97, %p98
    %p100 = scmp.ne.s32.totalorder %s91, %s92
    %p101 = scmp.eq.s32.totalorder %s18, 0
    %p102 = por %p100, %p101
    %p103 = scmp.ne.s32.totalorder %s91, %s92
    %p104 = scmp.eq.s32.totalorder %s19, 1
    %p105 = por %p103, %p104
    %p107 = scmp.ne.s32.totalorder %s92, %s106
    %p108 = scmp.eq.s32.totalorder %s19, 0
    %p109 = por %p107, %p108
    %s111 = sadd.s32 %s110, 1
    %p114 = scmp.eq.s32.totalorder %s13, 1
    %p115 = scmp.ne.s32.totalorder %s110, %s112
    %p116 = scmp.eq.s32.totalorder %s13, 0
    %p117 = por %p115, %p116
    %p118 = scmp.ne.s32.totalorder %s110, %s112
    %p119 = scmp.eq.s32.totalorder %s18, 1
    %p120 = por %p118, %p119
    %p121 = scmp.ne.s32.totalorder %s112, %s113
    %p122 = scmp.eq.s32.totalorder %s18, 0
    %p123 = por %p121, %p122
    %p124 = scmp.ne.s32.totalorder %s112, %s113
    %p125 = scmp.eq.s32.totalorder %s19, 1
    %p126 = por %p124, %p125
    %p128 = scmp.ne.s32.totalorder %s113, %s127
    %p129 = scmp.eq.s32.totalorder %s19, 0
    %p130 = por %p128, %p129
    %s132 = sadd.s32 %s131, 1
    %p135 = scmp.eq.s32.totalorder %s13, 1
    %p136 = scmp.ne.s32.totalorder %s131, %s133
    %p137 = scmp.eq.s32.totalorder %s13, 0
    %p138 = por %p136, %p137
    %p139 = scmp.ne.s32.totalorder %s131, %s133
    %p140 = scmp.eq.s32.totalorder %s18, 1
    %p141 = por %p139, %p140
    %p142 = scmp.ne.s32.totalorder %s133, %s134
    %p143 = scmp.eq.s32.totalorder %s18, 0
    %p144 = por %p142, %p143
    %p145 = scmp.ne.s32.totalorder %s133, %s134
    %p146 = scmp.eq.s32.totalorder %s19, 1
    %p147 = por %p145, %p146
    %p149 = scmp.ne.s32.totalorder %s134, %s148
    %p150 = scmp.eq.s32.totalorder %s19, 0
    %p151 = por %p149, %p150
    %s153 = sadd.s32 %s152, 1
    %p156 = scmp.eq.s32.totalorder %s13, 1
    %p157 = scmp.ne.s32.totalorder %s152, %s154
    %p158 = scmp.eq.s32.totalorder %s13, 0
    %p159 = por %p157, %p158
    %p160 = scmp.ne.s32.totalorder %s152, %s154
    %p161 = scmp.eq.s32.totalorder %s18, 1
    %p162 = por %p160, %p161
    %p163 = scmp.ne.s32.totalorder %s154, %s155
    %p164 = scmp.eq.s32.totalorder %s18, 0
    %p165 = por %p163, %p164
    %p166 = scmp.ne.s32.totalorder %s154, %s155
    %p167 = scmp.eq.s32.totalorder %s19, 1
    %p168 = por %p166, %p167
    %p170 = scmp.ne.s32.totalorder %s155, %s169
    %p171 = scmp.eq.s32.totalorder %s19, 0
    %p172 = por %p170, %p171
    %s173 = ssub.s32 %s13, %s20
    %p174 = scmp.eq.s32.totalorder %s173, 0
    %s176 = sadd.s32 %s175, 1
    %s177 = scalar_select %p174, %s175, %s176
    %p180 = pneg %p174
    %p181 = scmp.eq.s32.totalorder %s13, 1
    %p182 = por %p180, %p181
    %p183 = scmp.ne.s32.totalorder %s175, %s178
    %p184 = scmp.eq.s32.totalorder %s13, 0
    %p185 = por %p183, %p184
    %p186 = scmp.ne.s32.totalorder %s175, %s178
    %p187 = scmp.eq.s32.totalorder %s18, 1
    %p188 = por %p186, %p187
    %p189 = scmp.ne.s32.totalorder %s178, %s179
    %p190 = scmp.eq.s32.totalorder %s18, 0
    %p191 = por %p189, %p190
    %p192 = scmp.ne.s32.totalorder %s178, %s179
    %p193 = scmp.eq.s32.totalorder %s19, 1
    %p194 = por %p192, %p193
    %p196 = scmp.ne.s32.totalorder %s179, %s195
    %p197 = scmp.eq.s32.totalorder %s19, 0
    %p198 = por %p196, %p197
    %p199 = scmp.le.s32.totalorder 1, %s13
    %p200 = scmp.lt.s32.totalorder %s13, 3
    %p201 = pnand %p199, %p200
    %p202 = pneg %p201
    // Predicated region
    $region9: #{tpu_custom_call.1} parent=5 // pred_check
      _
    $region10: #{tpu_custom_call.1} parent=5 // pred_check_branch
      %204 = sbr.rel (%p201) target = $region12
    $region11: #{tpu_custom_call.1} parent=5 // pred_region
      %s205 = ssub.s32 %s13, 1
      // Predicated region
      $region13: #{tpu_custom_call.1} parent=11 // pred_check
        %p206 = pneg %p60
      $region14: #{tpu_custom_call.1} parent=11 // pred_check_branch
        %208 = sbr.rel (%p206) target = $region16
      $region15: #{tpu_custom_call.1} parent=11 // pred_region
        _
      $region16: #{tpu_custom_call.1} parent=11 // pred_fallthru
        _
      // Predicated region
      $region17: #{tpu_custom_call.1} parent=11 // pred_check
        %p209 = pneg %p81
      $region18: #{tpu_custom_call.1} parent=11 // pred_check_branch
        %211 = sbr.rel (%p209) target = $region20
      $region19: #{tpu_custom_call.1} parent=11 // pred_region
        _
      $region20: #{tpu_custom_call.1} parent=11 // pred_fallthru
        _
      // Predicated region
      $region21: #{tpu_custom_call.1} parent=11 // pred_check
        %p212 = pneg %p102
      $region22: #{tpu_custom_call.1} parent=11 // pred_check_branch
        %214 = sbr.rel (%p212) target = $region24
      $region23: #{tpu_custom_call.1} parent=11 // pred_region
        _
      $region24: #{tpu_custom_call.1} parent=11 // pred_fallthru
        _
      // Predicated region
      $region25: #{tpu_custom_call.1} parent=11 // pred_check
        %p215 = pneg %p123
      $region26: #{tpu_custom_call.1} parent=11 // pred_check_branch
        %217 = sbr.rel (%p215) target = $region28
      $region27: #{tpu_custom_call.1} parent=11 // pred_region
        _
      $region28: #{tpu_custom_call.1} parent=11 // pred_fallthru
        _
      // Predicated region
      $region29: #{tpu_custom_call.1} parent=11 // pred_check
        %p218 = pneg %p144
      $region30: #{tpu_custom_call.1} parent=11 // pred_check_branch
        %220 = sbr.rel (%p218) target = $region32
      $region31: #{tpu_custom_call.1} parent=11 // pred_region
        _
      $region32: #{tpu_custom_call.1} parent=11 // pred_fallthru
        _
      // Predicated region
      $region33: #{tpu_custom_call.1} parent=11 // pred_check
        %p221 = pneg %p165
      $region34: #{tpu_custom_call.1} parent=11 // pred_check_branch
        %223 = sbr.rel (%p221) target = $region36
      $region35: #{tpu_custom_call.1} parent=11 // pred_region
        _
      $region36: #{tpu_custom_call.1} parent=11 // pred_fallthru
        _
    $region12: #{tpu_custom_call.1} parent=5 // pred_fallthru
      _
    %p224 = scmp.lt.s32.totalorder %s13, 2
    // Predicated region
    $region37: #{tpu_custom_call.1} parent=5 // pred_check
      %p225 = pneg %p224
    $region38: #{tpu_custom_call.1} parent=5 // pred_check_branch
      %227 = sbr.rel (%p225) target = $region40
    $region39: #{tpu_custom_call.1} parent=5 // pred_region
      // Predicated region
      $region41: #{tpu_custom_call.1} parent=39 // pred_check
        %p228 = pneg %p33
      $region42: #{tpu_custom_call.1} parent=39 // pred_check_branch
        %230 = sbr.rel (%p228) target = $region44
      $region43: #{tpu_custom_call.1} parent=39 // pred_region
        %p231 = scmp.lt.s32.totalorder %s13, 1
        %s232 = scalar_select %p231, %s13, 1
        %s233 = smul.addr %s232, 32
        %s234 = smul.addr %s233, 8
        %s235 = scalar_lea.vmem %s0, %s234
      $region44: #{tpu_custom_call.1} parent=39 // pred_fallthru
        _
    $region40: #{tpu_custom_call.1} parent=5 // pred_fallthru
      _
    %p236 = scmp.le.s32.totalorder 1, %s13
    %p237 = scmp.lt.s32.totalorder %s13, 3
    %p238 = pnand %p236, %p237
    %p239 = pneg %p238
    // Predicated region
    $region45: #{tpu_custom_call.1} parent=5 // pred_check
      _
    $region46: #{tpu_custom_call.1} parent=5 // pred_check_branch
      %241 = sbr.rel (%p238) target = $region48
    $region47: #{tpu_custom_call.1} parent=5 // pred_region
      %s242 = ssub.s32 %s13, 1
      %p243 = scmp.lt.s32.totalorder %s18, 1
      %s244 = scalar_select %p243, %s18, 1
      %s245 = smul.addr %s244, 32
      %s246 = smul.addr %s245, 8
      %s247 = scalar_lea.vmem %s0, %s246
      %p248 = pneg %p39
      %p249 = pneg %p36
      %p250 = pneg %p60
      %p251 = pneg %p57
      %p252 = pneg %p81
      %p253 = pneg %p78
      %p254 = pneg %p102
      %p255 = pneg %p99
      %p256 = pneg %p123
      %p257 = pneg %p120
      %p258 = pneg %p144
      %p259 = pneg %p141
      %p260 = pneg %p165
      %p261 = pneg %p162
      %p262 = pneg %p191
      %p263 = pneg %p188
      %p264 = scmp.lt.s32.totalorder %s18, 1
      %s265 = scalar_select %p264, %s18, 1
      %s266 = smul.addr %s265, 32
      %s267 = smul.addr %s266, 8
      %s268 = scalar_lea.vmem %s7, %s267
      %p269 = scmp.lt.s32.totalorder %s18, 1
      %s270 = scalar_select %p269, %s18, 1
      %s271 = smul.addr %s270, 32
      %s272 = smul.addr %s271, 8
      %s273 = scalar_lea.vmem %s0, %s272
      %p274 = scmp.lt.s32.totalorder %s18, 1
      %s275 = scalar_select %p274, %s18, 1
      %s276 = smul.addr %s275, 32
      %s277 = smul.addr %s276, 8
      %s278 = scalar_lea.vmem %s7, %s277
      %v279 = vld [vmem:[%s273] sm:$0xff]
      %v280 = vld [vmem:[%s273 + $0x8] sm:$0xff]
      %v281 = vld [vmem:[%s273 + $0x10] sm:$0xff]
      %v282 = vld [vmem:[%s273 + $0x18] sm:$0xff]
      %v283 = vld [vmem:[%s273 + $0x20] sm:$0xff]
      %v284 = vld [vmem:[%s273 + $0x28] sm:$0xff]
      %v285 = vld [vmem:[%s273 + $0x30] sm:$0xff]
      %v286 = vld [vmem:[%s273 + $0x38] sm:$0xff]
      %v287 = vld [vmem:[%s273 + $0x40] sm:$0xff]
      %v288 = vld [vmem:[%s273 + $0x48] sm:$0xff]
      %v289 = vld [vmem:[%s273 + $0x50] sm:$0xff]
      %v290 = vld [vmem:[%s273 + $0x58] sm:$0xff]
      %v291 = vld [vmem:[%s273 + $0x60] sm:$0xff]
      %v292 = vld [vmem:[%s273 + $0x68] sm:$0xff]
      %v293 = vld [vmem:[%s273 + $0x70] sm:$0xff]
      %v294 = vld [vmem:[%s273 + $0x78] sm:$0xff]
      %v295 = vld [vmem:[%s273 + $0x80] sm:$0xff]
      %v296 = vld [vmem:[%s273 + $0x88] sm:$0xff]
      %v297 = vld [vmem:[%s273 + $0x90] sm:$0xff]
      %v298 = vld [vmem:[%s273 + $0x98] sm:$0xff]
      %v299 = vld [vmem:[%s273 + $0xa0] sm:$0xff]
      %v300 = vld [vmem:[%s273 + $0xa8] sm:$0xff]
      %v301 = vld [vmem:[%s273 + $0xb0] sm:$0xff]
      %v302 = vld [vmem:[%s273 + $0xb8] sm:$0xff]
      %v303 = vld [vmem:[%s273 + $0xc0] sm:$0xff]
      %v304 = vld [vmem:[%s273 + $0xc8] sm:$0xff]
      %v305 = vld [vmem:[%s273 + $0xd0] sm:$0xff]
      %v306 = vld [vmem:[%s273 + $0xd8] sm:$0xff]
      %v307 = vld [vmem:[%s273 + $0xe0] sm:$0xff]
      %v308 = vld [vmem:[%s273 + $0xe8] sm:$0xff]
      %v309 = vld [vmem:[%s273 + $0xf0] sm:$0xff]
      %v310 = vld [vmem:[%s273 + $0xf8] sm:$0xff]
      %v311 = vld [vmem:[%s1] sm:$0xf]
      %v312 = vld [vmem:[%s2] sm:$0x1]
      %v314 = vlaneseq
      %v315 = vshrl.u32 %v314, 7
      %v316 = vsub.s32 0, %v315
      %v317 = vrot.slane %v312, %v316
      %vm319 = vcmask 31744
      %v321 = vsel %vm319, %v279, 0
      %v324 = vsel %vm319, %v280, 0
      %v327 = vsel %vm319, %v281, 0
      %v330 = vsel %vm319, %v282, 0
      %v333 = vsel %vm319, %v283, 0
      %v336 = vsel %vm319, %v284, 0
      %v339 = vsel %vm319, %v285, 0
      %v342 = vsel %vm319, %v286, 0
      %v345 = vsel %vm319, %v287, 0
      %v348 = vsel %vm319, %v288, 0
      %v351 = vsel %vm319, %v289, 0
      %v354 = vsel %vm319, %v290, 0
      %v357 = vsel %vm319, %v291, 0
      %v360 = vsel %vm319, %v292, 0
      %v363 = vsel %vm319, %v293, 0
      %v366 = vsel %vm319, %v294, 0
      %v369 = vsel %vm319, %v295, 0
      %v372 = vsel %vm319, %v296, 0
      %v375 = vsel %vm319, %v297, 0
      %v378 = vsel %vm319, %v298, 0
      %v381 = vsel %vm319, %v299, 0
      %v384 = vsel %vm319, %v300, 0
      %v387 = vsel %vm319, %v301, 0
      %v390 = vsel %vm319, %v302, 0
      %v393 = vsel %vm319, %v303, 0
      %v396 = vsel %vm319, %v304, 0
      %v399 = vsel %vm319, %v305, 0
      %v402 = vsel %vm319, %v306, 0
      %v405 = vsel %vm319, %v307, 0
      %v408 = vsel %vm319, %v308, 0
      %v411 = vsel %vm319, %v309, 0
      %v414 = vsel %vm319, %v310, 0
      %vm416 = vcmask 1043456
      %v418 = vsel %vm416, %v311, 0
      %420 = vmatprep.subr.mxu0 0.0
      %421 = vmatpush1.msra.mxu0 %v418
      %422 = vmatprep.subr.mxu0 0.0
      %423 = vmatpush1.msra.mxu0 0.0
      %424 = vmatprep.subr.mxu0 0.0
      %425 = vmatpush1.msra.mxu0 0.0
      %426 = vmatprep.subr.mxu0 0.0
      %427 = vmatpush1.msra.mxu0 0.0
      %428 = vmatprep.subr.mxu0 0.0
      %429 = vmatpush1.msra.mxu0 0.0
      %430 = vmatprep.subr.mxu0 0.0
      %431 = vmatpush1.msra.mxu0 0.0
      %432 = vmatprep.subr.mxu0 0.0
      %433 = vmatpush1.msra.mxu0 0.0
      %434 = vmatprep.subr.mxu0 0.0
      %435 = vmatpush1.msra.mxu0 0.0
      %436 = vmatprep.subr.mxu0 0.0
      %437 = vmatpush1.msra.mxu0 0.0
      %438 = vmatprep.subr.mxu0 0.0
      %439 = vmatpush1.msra.mxu0 0.0
      %440 = vmatprep.subr.mxu0 0.0
      %441 = vmatpush1.msra.mxu0 0.0
      %442 = vmatprep.subr.mxu0 0.0
      %443 = vmatpush1.msra.mxu0 0.0
      %444 = vmatprep.subr.mxu0 0.0
      %445 = vmatpush1.msra.mxu0 0.0
      %446 = vmatprep.subr.mxu0 0.0
      %447 = vmatpush1.msra.mxu0 0.0
      %448 = vmatprep.subr.mxu0 0.0
      %449 = vmatpush1.msra.mxu0 0.0
      %450 = vmatprep.subr.mxu0 0.0
      %451 = vmatpush1.msra.mxu0 0.0
      %452 = vmatprep.subr.mxu0 0.0
      %453 = vmatpush1.msra.mxu0 0.0
      %454 = vmatprep.subr.mxu0 0.0
      %455 = vmatpush1.msra.mxu0 0.0
      %456 = vmatprep.subr.mxu0 0.0
      %457 = vmatpush1.msra.mxu0 0.0
      %458 = vmatprep.subr.mxu0 0.0
      %459 = vmatpush1.msra.mxu0 0.0
      %460 = vmatprep.subr.mxu0 0.0
      %461 = vmatpush1.msra.mxu0 0.0
      %462 = vmatprep.subr.mxu0 0.0
      %463 = vmatpush1.msra.mxu0 0.0
      %464 = vmatprep.subr.mxu0 0.0
      %465 = vmatpush1.msra.mxu0 0.0
      %466 = vmatprep.subr.mxu0 0.0
      %467 = vmatpush1.msra.mxu0 0.0
      %468 = vmatprep.subr.mxu0 0.0
      %469 = vmatpush1.msra.mxu0 0.0
      %470 = vmatprep.subr.mxu0 0.0
      %471 = vmatpush1.msra.mxu0 0.0
      %472 = vmatprep.subr.mxu0 0.0
      %473 = vmatpush1.msra.mxu0 0.0
      %474 = vmatprep.subr.mxu0 0.0
      %475 = vmatpush1.msra.mxu0 0.0
      %476 = vmatprep.subr.mxu0 0.0
      %477 = vmatpush1.msra.mxu0 0.0
      %478 = vmatprep.subr.mxu0 0.0
      %479 = vmatpush1.msra.mxu0 0.0
      %480 = vmatprep.subr.mxu0 0.0
      %481 = vmatpush1.msra.mxu0 0.0
      %482 = vmatprep.subr.mxu0 0.0
      %483 = vmatpush1.msra.mxu0 0.0
      %484 = vmatprep.mubr.f32.mxu0 0.0
      %485 = vmatmul.mubr.f32.gmra.mrb[0].mxu0 %v321
      %v486 = vpop.f32.mrb[0].mxu0
      %v487 = vadd.f32 %v317, %v486
      %v488 = vpop.f32.mrb[0].mxu0
      %489 = vmatprep.mubr.f32.mxu0 0.0
      %490 = vmatmul.mubr.f32.gmra.mrb[0].mxu0 %v324
      %v491 = vpop.f32.mrb[0].mxu0
      %v492 = vadd.f32 %v317, %v491
      %v493 = vpop.f32.mrb[0].mxu0
      %494 = vmatprep.mubr.f32.mxu0 0.0
      %495 = vmatmul.mubr.f32.gmra.mrb[0].mxu0 %v327
      %v496 = vpop.f32.mrb[0].mxu0
      %v497 = vadd.f32 %v317, %v496
      %v498 = vpop.f32.mrb[0].mxu0
      %499 = vmatprep.mubr.f32.mxu0 0.0
      %500 = vmatmul.mubr.f32.gmra.mrb[0].mxu0 %v330
      %v501 = vpop.f32.mrb[0].mxu0
      %v502 = vadd.f32 %v317, %v501
      %v503 = vpop.f32.mrb[0].mxu0
      %504 = vmatprep.mubr.f32.mxu0 0.0
      %505 = vmatmul.mubr.f32.gmra.mrb[0].mxu0 %v333
      %v506 = vpop.f32.mrb[0].mxu0
      %v507 = vadd.f32 %v317, %v506
      %v508 = vpop.f32.mrb[0].mxu0
      %509 = vmatprep.mubr.f32.mxu0 0.0
      %510 = vmatmul.mubr.f32.gmra.mrb[0].mxu0 %v336
      %v511 = vpop.f32.mrb[0].mxu0
      %v512 = vadd.f32 %v317, %v511
      %v513 = vpop.f32.mrb[0].mxu0
      %514 = vmatprep.mubr.f32.mxu0 0.0
      %515 = vmatmul.mubr.f32.gmra.mrb[0].mxu0 %v339
      %v516 = vpop.f32.mrb[0].mxu0
      %v517 = vadd.f32 %v317, %v516
      %v518 = vpop.f32.mrb[0].mxu0
      %519 = vmatprep.mubr.f32.mxu0 0.0
      %520 = vmatmul.mubr.f32.gmra.mrb[0].mxu0 %v342
      %v521 = vpop.f32.mrb[0].mxu0
      %v522 = vadd.f32 %v317, %v521
      %v523 = vpop.f32.mrb[0].mxu0
      %524 = vmatprep.mubr.f32.mxu0 0.0
      %525 = vmatmul.mubr.f32.gmra.mrb[0].mxu0 %v345
      %v526 = vpop.f32.mrb[0].mxu0
      %v527 = vadd.f32 %v317, %v526
      %v528 = vpop.f32.mrb[0].mxu0
      %529 = vmatprep.mubr.f32.mxu0 0.0
      %530 = vmatmul.mubr.f32.gmra.mrb[0].mxu0 %v348
      %v531 = vpop.f32.mrb[0].mxu0
      %v532 = vadd.f32 %v317, %v531
      %v533 = vpop.f32.mrb[0].mxu0
      %534 = vmatprep.mubr.f32.mxu0 0.0
      %535 = vmatmul.mubr.f32.gmra.mrb[0].mxu0 %v351
      %v536 = vpop.f32.mrb[0].mxu0
      %v537 = vadd.f32 %v317, %v536
      %v538 = vpop.f32.mrb[0].mxu0
      %539 = vmatprep.mubr.f32.mxu0 0.0
      %540 = vmatmul.mubr.f32.gmra.mrb[0].mxu0 %v354
      %v541 = vpop.f32.mrb[0].mxu0
      %v542 = vadd.f32 %v317, %v541
      %v543 = vpop.f32.mrb[0].mxu0
      %544 = vmatprep.mubr.f32.mxu0 0.0
      %545 = vmatmul.mubr.f32.gmra.mrb[0].mxu0 %v357
      %v546 = vpop.f32.mrb[0].mxu0
      %v547 = vadd.f32 %v317, %v546
      %v548 = vpop.f32.mrb[0].mxu0
      %549 = vmatprep.mubr.f32.mxu0 0.0
      %550 = vmatmul.mubr.f32.gmra.mrb[0].mxu0 %v360
      %v551 = vpop.f32.mrb[0].mxu0
      %v552 = vadd.f32 %v317, %v551
      %v553 = vpop.f32.mrb[0].mxu0
      %554 = vmatprep.mubr.f32.mxu0 0.0
      %555 = vmatmul.mubr.f32.gmra.mrb[0].mxu0 %v363
      %v556 = vpop.f32.mrb[0].mxu0
      %v557 = vadd.f32 %v317, %v556
      %v558 = vpop.f32.mrb[0].mxu0
      %559 = vmatprep.mubr.f32.mxu0 0.0
      %560 = vmatmul.mubr.f32.gmra.mrb[0].mxu0 %v366
      %v561 = vpop.f32.mrb[0].mxu0
      %v562 = vadd.f32 %v317, %v561
      %v563 = vpop.f32.mrb[0].mxu0
      %564 = vmatprep.mubr.f32.mxu0 0.0
      %565 = vmatmul.mubr.f32.gmra.mrb[0].mxu0 %v369
      %v566 = vpop.f32.mrb[0].mxu0
      %v567 = vadd.f32 %v317, %v566
      %v568 = vpop.f32.mrb[0].mxu0
      %569 = vmatprep.mubr.f32.mxu0 0.0
      %570 = vmatmul.mubr.f32.gmra.mrb[0].mxu0 %v372
      %v571 = vpop.f32.mrb[0].mxu0
      %v572 = vadd.f32 %v317, %v571
      %v573 = vpop.f32.mrb[0].mxu0
      %574 = vmatprep.mubr.f32.mxu0 0.0
      %575 = vmatmul.mubr.f32.gmra.mrb[0].mxu0 %v375
      %v576 = vpop.f32.mrb[0].mxu0
      %v577 = vadd.f32 %v317, %v576
      %v578 = vpop.f32.mrb[0].mxu0
      %579 = vmatprep.mubr.f32.mxu0 0.0
      %580 = vmatmul.mubr.f32.gmra.mrb[0].mxu0 %v378
      %v581 = vpop.f32.mrb[0].mxu0
      %v582 = vadd.f32 %v317, %v581
      %v583 = vpop.f32.mrb[0].mxu0
      %584 = vmatprep.mubr.f32.mxu0 0.0
      %585 = vmatmul.mubr.f32.gmra.mrb[0].mxu0 %v381
      %v586 = vpop.f32.mrb[0].mxu0
      %v587 = vadd.f32 %v317, %v586
      %v588 = vpop.f32.mrb[0].mxu0
      %589 = vmatprep.mubr.f32.mxu0 0.0
      %590 = vmatmul.mubr.f32.gmra.mrb[0].mxu0 %v384
      %v591 = vpop.f32.mrb[0].mxu0
      %v592 = vadd.f32 %v317, %v591
      %v593 = vpop.f32.mrb[0].mxu0
      %594 = vmatprep.mubr.f32.mxu0 0.0
      %595 = vmatmul.mubr.f32.gmra.mrb[0].mxu0 %v387
      %v596 = vpop.f32.mrb[0].mxu0
      %v597 = vadd.f32 %v317, %v596
      %v598 = vpop.f32.mrb[0].mxu0
      %599 = vmatprep.mubr.f32.mxu0 0.0
      %600 = vmatmul.mubr.f32.gmra.mrb[0].mxu0 %v390
      %v601 = vpop.f32.mrb[0].mxu0
      %v602 = vadd.f32 %v317, %v601
      %v603 = vpop.f32.mrb[0].mxu0
      %604 = vmatprep.mubr.f32.mxu0 0.0
      %605 = vmatmul.mubr.f32.gmra.mrb[0].mxu0 %v393
      %v606 = vpop.f32.mrb[0].mxu0
      %v607 = vadd.f32 %v317, %v606
      %v608 = vpop.f32.mrb[0].mxu0
      %609 = vmatprep.mubr.f32.mxu0 0.0
      %610 = vmatmul.mubr.f32.gmra.mrb[0].mxu0 %v396
      %v611 = vpop.f32.mrb[0].mxu0
      %v612 = vadd.f32 %v317, %v611
      %v613 = vpop.f32.mrb[0].mxu0
      %614 = vmatprep.mubr.f32.mxu0 0.0
      %615 = vmatmul.mubr.f32.gmra.mrb[0].mxu0 %v399
      %v616 = vpop.f32.mrb[0].mxu0
      %v617 = vadd.f32 %v317, %v616
      %v618 = vpop.f32.mrb[0].mxu0
      %619 = vmatprep.mubr.f32.mxu0 0.0
      %620 = vmatmul.mubr.f32.gmra.mrb[0].mxu0 %v402
      %v621 = vpop.f32.mrb[0].mxu0
      %v622 = vadd.f32 %v317, %v621
      %v623 = vpop.f32.mrb[0].mxu0
      %624 = vmatprep.mubr.f32.mxu0 0.0
      %625 = vmatmul.mubr.f32.gmra.mrb[0].mxu0 %v405
      %v626 = vpop.f32.mrb[0].mxu0
      %v627 = vadd.f32 %v317, %v626
      %v628 = vpop.f32.mrb[0].mxu0
      %629 = vmatprep.mubr.f32.mxu0 0.0
      %630 = vmatmul.mubr.f32.gmra.mrb[0].mxu0 %v408
      %v631 = vpop.f32.mrb[0].mxu0
      %v632 = vadd.f32 %v317, %v631
      %v633 = vpop.f32.mrb[0].mxu0
      %634 = vmatprep.mubr.f32.mxu0 0.0
      %635 = vmatmul.mubr.f32.gmra.mrb[0].mxu0 %v411
      %v636 = vpop.f32.mrb[0].mxu0
      %v637 = vadd.f32 %v317, %v636
      %v638 = vpop.f32.mrb[0].mxu0
      %639 = vmatprep.mubr.f32.mxu0 0.0
      %640 = vmatmul.mubr.f32.gmra.mrb[0].mxu0 %v414
      %v641 = vpop.f32.mrb[0].mxu0
      %v642 = vadd.f32 %v317, %v641
      %v643 = vpop.f32.mrb[0].mxu0
      %644 = vdwg.mxu0
      %v645 = vmax.f32 %v487, 0.0
      %v646 = vmax.f32 %v492, 0.0
      %v647 = vmax.f32 %v497, 0.0
      %v648 = vmax.f32 %v502, 0.0
      %v649 = vmax.f32 %v507, 0.0
      %v650 = vmax.f32 %v512, 0.0
      %v651 = vmax.f32 %v517, 0.0
      %v652 = vmax.f32 %v522, 0.0
      %v653 = vmax.f32 %v527, 0.0
      %v654 = vmax.f32 %v532, 0.0
      %v655 = vmax.f32 %v537, 0.0
      %v656 = vmax.f32 %v542, 0.0
      %v657 = vmax.f32 %v547, 0.0
      %v658 = vmax.f32 %v552, 0.0
      %v659 = vmax.f32 %v557, 0.0
      %v660 = vmax.f32 %v562, 0.0
      %v661 = vmax.f32 %v567, 0.0
      %v662 = vmax.f32 %v572, 0.0
      %v663 = vmax.f32 %v577, 0.0
      %v664 = vmax.f32 %v582, 0.0
      %v665 = vmax.f32 %v587, 0.0
      %v666 = vmax.f32 %v592, 0.0
      %v667 = vmax.f32 %v597, 0.0
      %v668 = vmax.f32 %v602, 0.0
      %v669 = vmax.f32 %v607, 0.0
      %v670 = vmax.f32 %v612, 0.0
      %v671 = vmax.f32 %v617, 0.0
      %v672 = vmax.f32 %v622, 0.0
      %v673 = vmax.f32 %v627, 0.0
      %v674 = vmax.f32 %v632, 0.0
      %v675 = vmax.f32 %v637, 0.0
      %v676 = vmax.f32 %v642, 0.0
      %v677 = vmin.f32 %v645, 6.0
      %v678 = vmin.f32 %v646, 6.0
      %v679 = vmin.f32 %v647, 6.0
      %v680 = vmin.f32 %v648, 6.0
      %v681 = vmin.f32 %v649, 6.0
      %v682 = vmin.f32 %v650, 6.0
      %v683 = vmin.f32 %v651, 6.0
      %v684 = vmin.f32 %v652, 6.0
      %v685 = vmin.f32 %v653, 6.0
      %v686 = vmin.f32 %v654, 6.0
      %v687 = vmin.f32 %v655, 6.0
      %v688 = vmin.f32 %v656, 6.0
      %v689 = vmin.f32 %v657, 6.0
      %v690 = vmin.f32 %v658, 6.0
      %v691 = vmin.f32 %v659, 6.0
      %v692 = vmin.f32 %v660, 6.0
      %v693 = vmin.f32 %v661, 6.0
      %v694 = vmin.f32 %v662, 6.0
      %v695 = vmin.f32 %v663, 6.0
      %v696 = vmin.f32 %v664, 6.0
      %v697 = vmin.f32 %v665, 6.0
      %v698 = vmin.f32 %v666, 6.0
      %v699 = vmin.f32 %v667, 6.0
      %v700 = vmin.f32 %v668, 6.0
      %v701 = vmin.f32 %v669, 6.0
      %v702 = vmin.f32 %v670, 6.0
      %v703 = vmin.f32 %v671, 6.0
      %v704 = vmin.f32 %v672, 6.0
      %v705 = vmin.f32 %v673, 6.0
      %v706 = vmin.f32 %v674, 6.0
      %v707 = vmin.f32 %v675, 6.0
      %v708 = vmin.f32 %v676, 6.0
      %vm709 = vcmask 195584
      %710 = vst.msk [vmem:[#allocation2] sm:$0xff] %vm709, 0.0
      %711 = vst.msk [vmem:[#allocation2 + $0x8] sm:$0xff] %vm709, 0.0
      %712 = vst.msk [vmem:[#allocation2 + $0x10] sm:$0xff] %vm709, 0.0
      %713 = vst.msk [vmem:[#allocation2 + $0x18] sm:$0xff] %vm709, 0.0
      %714 = vst.msk [vmem:[#allocation2 + $0x20] sm:$0xff] %vm709, 0.0
      %715 = vst.msk [vmem:[#allocation2 + $0x28] sm:$0xff] %vm709, 0.0
      %716 = vst.msk [vmem:[#allocation2 + $0x30] sm:$0xff] %vm709, 0.0
      %717 = vst.msk [vmem:[#allocation2 + $0x38] sm:$0xff] %vm709, 0.0
      %718 = vst.msk [vmem:[#allocation2 + $0x40] sm:$0xff] %vm709, 0.0
      %719 = vst.msk [vmem:[#allocation2 + $0x48] sm:$0xff] %vm709, 0.0
      %720 = vst.msk [vmem:[#allocation2 + $0x50] sm:$0xff] %vm709, 0.0
      %721 = vst.msk [vmem:[#allocation2 + $0x58] sm:$0xff] %vm709, 0.0
      %722 = vst.msk [vmem:[#allocation2 + $0x60] sm:$0xff] %vm709, 0.0
      %723 = vst.msk [vmem:[#allocation2 + $0x68] sm:$0xff] %vm709, 0.0
      %724 = vst.msk [vmem:[#allocation2 + $0x70] sm:$0xff] %vm709, 0.0
      %725 = vst.msk [vmem:[#allocation2 + $0x78] sm:$0xff] %vm709, 0.0
      %726 = vst.msk [vmem:[#allocation2 + $0x80] sm:$0xff] %vm709, 0.0
      %727 = vst.msk [vmem:[#allocation2 + $0x88] sm:$0xff] %vm709, 0.0
      %728 = vst.msk [vmem:[#allocation2 + $0x90] sm:$0xff] %vm709, 0.0
      %729 = vst.msk [vmem:[#allocation2 + $0x98] sm:$0xff] %vm709, 0.0
      %730 = vst.msk [vmem:[#allocation2 + $0xa0] sm:$0xff] %vm709, 0.0
      %731 = vst.msk [vmem:[#allocation2 + $0xa8] sm:$0xff] %vm709, 0.0
      %732 = vst.msk [vmem:[#allocation2 + $0xb0] sm:$0xff] %vm709, 0.0
      %733 = vst.msk [vmem:[#allocation2 + $0xb8] sm:$0xff] %vm709, 0.0
      %734 = vst.msk [vmem:[#allocation2 + $0xc0] sm:$0xff] %vm709, 0.0
      %735 = vst.msk [vmem:[#allocation2 + $0xc8] sm:$0xff] %vm709, 0.0
      %736 = vst.msk [vmem:[#allocation2 + $0xd0] sm:$0xff] %vm709, 0.0
      %737 = vst.msk [vmem:[#allocation2 + $0xd8] sm:$0xff] %vm709, 0.0
      %738 = vst.msk [vmem:[#allocation2 + $0xe0] sm:$0xff] %vm709, 0.0
      %739 = vst.msk [vmem:[#allocation2 + $0xe8] sm:$0xff] %vm709, 0.0
      %740 = vst.msk [vmem:[#allocation2 + $0xf0] sm:$0xff] %vm709, 0.0
      %741 = vst.msk [vmem:[#allocation2 + $0xf8] sm:$0xff] %vm709, 0.0
      %742 = vst.msk [vmem:[#allocation2 + $0x100] sm:$0xff] %vm709, 0.0
      %743 = vst.msk [vmem:[#allocation2 + $0x108] sm:$0xff] %vm709, 0.0
      %744 = vst.msk [vmem:[#allocation2 + $0x110] sm:$0xff] %vm709, 0.0
      %745 = vst.msk [vmem:[#allocation2 + $0x118] sm:$0xff] %vm709, 0.0
      %746 = vst.msk [vmem:[#allocation2 + $0x120] sm:$0xff] %vm709, 0.0
      %747 = vst.msk [vmem:[#allocation2 + $0x128] sm:$0xff] %vm709, 0.0
      %748 = vst.msk [vmem:[#allocation2 + $0x130] sm:$0xff] %vm709, 0.0
      %749 = vst.msk [vmem:[#allocation2 + $0x138] sm:$0xff] %vm709, 0.0
      %750 = vst.msk [vmem:[#allocation2 + $0x140] sm:$0xff] %vm709, 0.0
      %751 = vst.msk [vmem:[#allocation2 + $0x148] sm:$0xff] %vm709, 0.0
      %752 = vst.msk [vmem:[#allocation2 + $0x150] sm:$0xff] %vm709, 0.0
      %753 = vst.msk [vmem:[#allocation2 + $0x158] sm:$0xff] %vm709, 0.0
      %754 = vst.msk [vmem:[#allocation2 + $0x160] sm:$0xff] %vm709, 0.0
      %755 = vst.msk [vmem:[#allocation2 + $0x168] sm:$0xff] %vm709, 0.0
      %756 = vst.msk [vmem:[#allocation2 + $0x170] sm:$0xff] %vm709, 0.0
      %757 = vst.msk [vmem:[#allocation2 + $0x178] sm:$0xff] %vm709, 0.0
      %758 = vst.msk [vmem:[#allocation2 + $0x180] sm:$0xff] %vm709, 0.0
      %759 = vst.msk [vmem:[#allocation2 + $0x188] sm:$0xff] %vm709, 0.0
      %760 = vst.msk [vmem:[#allocation2 + $0x190] sm:$0xff] %vm709, 0.0
      %761 = vst.msk [vmem:[#allocation2 + $0x198] sm:$0xff] %vm709, 0.0
      %762 = vst.msk [vmem:[#allocation2 + $0x1a0] sm:$0xff] %vm709, 0.0
      %763 = vst.msk [vmem:[#allocation2 + $0x1a8] sm:$0xff] %vm709, 0.0
      %s764 = scalar_lea.vmem [#allocation2], 24
      %765 = vst.msk [vmem:[%s764 + $0x1] sm:$0xff] %vm709, %v677
      %766 = vst.msk [vmem:[%s764 + $0x9] sm:$0xff] %vm709, %v678
      %767 = vst.msk [vmem:[%s764 + $0x19] sm:$0xff] %vm709, %v679
      %768 = vst.msk [vmem:[%s764 + $0x21] sm:$0xff] %vm709, %v680
      %769 = vst.msk [vmem:[%s764 + $0x31] sm:$0xff] %vm709, %v681
      %770 = vst.msk [vmem:[%s764 + $0x39] sm:$0xff] %vm709, %v682
      %771 = vst.msk [vmem:[%s764 + $0x49] sm:$0xff] %vm709, %v683
      %772 = vst.msk [vmem:[%s764 + $0x51] sm:$0xff] %vm709, %v684
      %773 = vst.msk [vmem:[%s764 + $0x61] sm:$0xff] %vm709, %v685
      %774 = vst.msk [vmem:[%s764 + $0x69] sm:$0xff] %vm709, %v686
      %775 = vst.msk [vmem:[%s764 + $0x79] sm:$0xff] %vm709, %v687
      %776 = vst.msk [vmem:[%s764 + $0x81] sm:$0xff] %vm709, %v688
      %777 = vst.msk [vmem:[%s764 + $0x91] sm:$0xff] %vm709, %v689
      %778 = vst.msk [vmem:[%s764 + $0x99] sm:$0xff] %vm709, %v690
      %779 = vst.msk [vmem:[%s764 + $0xa9] sm:$0xff] %vm709, %v691
      %780 = vst.msk [vmem:[%s764 + $0xb1] sm:$0xff] %vm709, %v692
      %781 = vst.msk [vmem:[%s764 + $0xc1] sm:$0xff] %vm709, %v693
      %782 = vst.msk [vmem:[%s764 + $0xc9] sm:$0xff] %vm709, %v694
      %783 = vst.msk [vmem:[%s764 + $0xd9] sm:$0xff] %vm709, %v695
      %784 = vst.msk [vmem:[%s764 + $0xe1] sm:$0xff] %vm709, %v696
      %785 = vst.msk [vmem:[%s764 + $0xf1] sm:$0xff] %vm709, %v697
      %786 = vst.msk [vmem:[%s764 + $0xf9] sm:$0xff] %vm709, %v698
      %787 = vst.msk [vmem:[%s764 + $0x109] sm:$0xff] %vm709, %v699
      %788 = vst.msk [vmem:[%s764 + $0x111] sm:$0xff] %vm709, %v700
      %789 = vst.msk [vmem:[%s764 + $0x121] sm:$0xff] %vm709, %v701
      %790 = vst.msk [vmem:[%s764 + $0x129] sm:$0xff] %vm709, %v702
      %791 = vst.msk [vmem:[%s764 + $0x139] sm:$0xff] %vm709, %v703
      %792 = vst.msk [vmem:[%s764 + $0x141] sm:$0xff] %vm709, %v704
      %793 = vst.msk [vmem:[%s764 + $0x151] sm:$0xff] %vm709, %v705
      %794 = vst.msk [vmem:[%s764 + $0x159] sm:$0xff] %vm709, %v706
      %795 = vst.msk [vmem:[%s764 + $0x169] sm:$0xff] %vm709, %v707
      %796 = vst.msk [vmem:[%s764 + $0x171] sm:$0xff] %vm709, %v708
      %v797 = vld [vmem:[%s3] sm:$0xff]
      %v798 = vld [vmem:[%s3 + $0x8] sm:$0x1]
      %v799 = vld [vmem:[#allocation2] sm:$0xff]
      %v800 = vld [vmem:[#allocation2 + $0x8] sm:$0xff]
      %v801 = vld [vmem:[#allocation2 + $0x18] sm:$0xff]
      %v802 = vld [vmem:[#allocation2 + $0x20] sm:$0xff]
      %v803 = vld [vmem:[#allocation2 + $0x30] sm:$0xff]
      %v804 = vld [vmem:[#allocation2 + $0x38] sm:$0xff]
      %v805 = vld [vmem:[#allocation2 + $0x48] sm:$0xff]
      %v806 = vld [vmem:[#allocation2 + $0x50] sm:$0xff]
      %v807 = vld [vmem:[#allocation2 + $0x60] sm:$0xff]
      %v808 = vld [vmem:[#allocation2 + $0x68] sm:$0xff]
      %v809 = vld [vmem:[#allocation2 + $0x78] sm:$0xff]
      %v810 = vld [vmem:[#allocation2 + $0x80] sm:$0xff]
      %v811 = vld [vmem:[#allocation2 + $0x90] sm:$0xff]
      %v812 = vld [vmem:[#allocation2 + $0x98] sm:$0xff]
      %v813 = vld [vmem:[#allocation2 + $0xa8] sm:$0xff]
      %v814 = vld [vmem:[#allocation2 + $0xb0] sm:$0xff]
      %v815 = vld [vmem:[#allocation2 + $0xc0] sm:$0xff]
      %v816 = vld [vmem:[#allocation2 + $0xc8] sm:$0xff]
      %v817 = vld [vmem:[#allocation2 + $0xd8] sm:$0xff]
      %v818 = vld [vmem:[#allocation2 + $0xe0] sm:$0xff]
      %v819 = vld [vmem:[#allocation2 + $0xf0] sm:$0xff]
      %v820 = vld [vmem:[#allocation2 + $0xf8] sm:$0xff]
      %v821 = vld [vmem:[#allocation2 + $0x108] sm:$0xff]
      %v822 = vld [vmem:[#allocation2 + $0x110] sm:$0xff]
      %v823 = vld [vmem:[#allocation2 + $0x120] sm:$0xff]
      %v824 = vld [vmem:[#allocation2 + $0x128] sm:$0xff]
      %v825 = vld [vmem:[#allocation2 + $0x138] sm:$0xff]
      %v826 = vld [vmem:[#allocation2 + $0x140] sm:$0xff]
      %v827 = vld [vmem:[#allocation2 + $0x150] sm:$0xff]
      %v828 = vld [vmem:[#allocation2 + $0x158] sm:$0xff]
      %v829 = vld [vmem:[#allocation2 + $0x168] sm:$0xff]
      %v830 = vld [vmem:[#allocation2 + $0x170] sm:$0xff]
      %v831 = vlaneseq
      %v832 = vshrl.u32 %v831, 7
      %v833 = vsub.s32 0, %v832
      %v834 = vrot.slane %v797, %v833
      %v835 = vmul.f32 %v799, %v834
      %v836 = vmul.f32 %v800, %v834
      %v837 = vmul.f32 %v801, %v834
      %v838 = vmul.f32 %v802, %v834
      %v839 = vmul.f32 %v803, %v834
      %v840 = vmul.f32 %v804, %v834
      %v841 = vmul.f32 %v805, %v834
      %v842 = vmul.f32 %v806, %v834
      %v843 = vmul.f32 %v807, %v834
      %v844 = vmul.f32 %v808, %v834
      %v845 = vmul.f32 %v809, %v834
      %v846 = vmul.f32 %v810, %v834
      %v847 = vmul.f32 %v811, %v834
      %v848 = vmul.f32 %v812, %v834
      %v849 = vmul.f32 %v813, %v834
      %v850 = vmul.f32 %v814, %v834
      %v851 = vmul.f32 %v815, %v834
      %v852 = vmul.f32 %v816, %v834
      %v853 = vmul.f32 %v817, %v834
      %v854 = vmul.f32 %v818, %v834
      %v855 = vmul.f32 %v819, %v834
      %v856 = vmul.f32 %v820, %v834
      %v857 = vmul.f32 %v821, %v834
      %v858 = vmul.f32 %v822, %v834
      %v859 = vmul.f32 %v823, %v834
      %v860 = vmul.f32 %v824, %v834
      %v861 = vmul.f32 %v825, %v834
      %v862 = vmul.f32 %v826, %v834
      %v863 = vmul.f32 %v827, %v834
      %v864 = vmul.f32 %v828, %v834
      %v865 = vmul.f32 %v829, %v834
      %v866 = vmul.f32 %v830, %v834
      %v867 = vld [vmem:[#allocation2 + $0x1] sm:$0xff]
      %v868 = vld [vmem:[#allocation2 + $0x9] sm:$0xff]
      %v869 = vld [vmem:[#allocation2 + $0x19] sm:$0xff]
      %v870 = vld [vmem:[#allocation2 + $0x21] sm:$0xff]
      %v871 = vld [vmem:[#allocation2 + $0x31] sm:$0xff]
      %v872 = vld [vmem:[#allocation2 + $0x39] sm:$0xff]
      %v873 = vld [vmem:[#allocation2 + $0x49] sm:$0xff]
      %v874 = vld [vmem:[#allocation2 + $0x51] sm:$0xff]
      %v875 = vld [vmem:[#allocation2 + $0x61] sm:$0xff]
      %v876 = vld [vmem:[#allocation2 + $0x69] sm:$0xff]
      %v877 = vld [vmem:[#allocation2 + $0x79] sm:$0xff]
      %v878 = vld [vmem:[#allocation2 + $0x81] sm:$0xff]
      %v879 = vld [vmem:[#allocation2 + $0x91] sm:$0xff]
      %v880 = vld [vmem:[#allocation2 + $0x99] sm:$0xff]
      %v881 = vld [vmem:[#allocation2 + $0xa9] sm:$0xff]
      %v882 = vld [vmem:[#allocation2 + $0xb1] sm:$0xff]
      %v883 = vld [vmem:[#allocation2 + $0xc1] sm:$0xff]
      %v884 = vld [vmem:[#allocation2 + $0xc9] sm:$0xff]
      %v885 = vld [vmem:[#allocation2 + $0xd9] sm:$0xff]
      %v886 = vld [vmem:[#allocation2 + $0xe1] sm:$0xff]
      %v887 = vld [vmem:[#allocation2 + $0xf1] sm:$0xff]
      %v888 = vld [vmem:[#allocation2 + $0xf9] sm:$0xff]
      %v889 = vld [vmem:[#allocation2 + $0x109] sm:$0xff]
      %v890 = vld [vmem:[#allocation2 + $0x111] sm:$0xff]
      %v891 = vld [vmem:[#allocation2 + $0x121] sm:$0xff]
      %v892 = vld [vmem:[#allocation2 + $0x129] sm:$0xff]
      %v893 = vld [vmem:[#allocation2 + $0x139] sm:$0xff]
      %v894 = vld [vmem:[#allocation2 + $0x141] sm:$0xff]
      %v895 = vld [vmem:[#allocation2 + $0x151] sm:$0xff]
      %v896 = vld [vmem:[#allocation2 + $0x159] sm:$0xff]
      %v897 = vld [vmem:[#allocation2 + $0x169] sm:$0xff]
      %v898 = vld [vmem:[#allocation2 + $0x171] sm:$0xff]
      %v899 = vlaneseq
      %v900 = vshrl.u32 %v899, 7
      %v901 = vsub.s32 1, %v900
      %v902 = vrot.slane %v797, %v901
      %v903 = vmul.f32 %v867, %v902
      %v904 = vmul.f32 %v868, %v902
      %v905 = vmul.f32 %v869, %v902
      %v906 = vmul.f32 %v870, %v902
      %v907 = vmul.f32 %v871, %v902
      %v908 = vmul.f32 %v872, %v902
      %v909 = vmul.f32 %v873, %v902
      %v910 = vmul.f32 %v874, %v902
      %v911 = vmul.f32 %v875, %v902
      %v912 = vmul.f32 %v876, %v902
      %v913 = vmul.f32 %v877, %v902
      %v914 = vmul.f32 %v878, %v902
      %v915 = vmul.f32 %v879, %v902
      %v916 = vmul.f32 %v880, %v902
      %v917 = vmul.f32 %v881, %v902
      %v918 = vmul.f32 %v882, %v902
      %v919 = vmul.f32 %v883, %v902
      %v920 = vmul.f32 %v884, %v902
      %v921 = vmul.f32 %v885, %v902
      %v922 = vmul.f32 %v886, %v902
      %v923 = vmul.f32 %v887, %v902
      %v924 = vmul.f32 %v888, %v902
      %v925 = vmul.f32 %v889, %v902
      %v926 = vmul.f32 %v890, %v902
      %v927 = vmul.f32 %v891, %v902
      %v928 = vmul.f32 %v892, %v902
      %v929 = vmul.f32 %v893, %v902
      %v930 = vmul.f32 %v894, %v902
      %v931 = vmul.f32 %v895, %v902
      %v932 = vmul.f32 %v896, %v902
      %v933 = vmul.f32 %v897, %v902
      %v934 = vmul.f32 %v898, %v902
      %v935 = vadd.f32 %v835, %v903
      %v936 = vadd.f32 %v836, %v904
      %v937 = vadd.f32 %v837, %v905
      %v938 = vadd.f32 %v838, %v906
      %v939 = vadd.f32 %v839, %v907
      %v940 = vadd.f32 %v840, %v908
      %v941 = vadd.f32 %v841, %v909
      %v942 = vadd.f32 %v842, %v910
      %v943 = vadd.f32 %v843, %v911
      %v944 = vadd.f32 %v844, %v912
      %v945 = vadd.f32 %v845, %v913
      %v946 = vadd.f32 %v846, %v914
      %v947 = vadd.f32 %v847, %v915
      %v948 = vadd.f32 %v848, %v916
      %v949 = vadd.f32 %v849, %v917
      %v950 = vadd.f32 %v850, %v918
      %v951 = vadd.f32 %v851, %v919
      %v952 = vadd.f32 %v852, %v920
      %v953 = vadd.f32 %v853, %v921
      %v954 = vadd.f32 %v854, %v922
      %v955 = vadd.f32 %v855, %v923
      %v956 = vadd.f32 %v856, %v924
      %v957 = vadd.f32 %v857, %v925
      %v958 = vadd.f32 %v858, %v926
      %v959 = vadd.f32 %v859, %v927
      %v960 = vadd.f32 %v860, %v928
      %v961 = vadd.f32 %v861, %v929
      %v962 = vadd.f32 %v862, %v930
      %v963 = vadd.f32 %v863, %v931
      %v964 = vadd.f32 %v864, %v932
      %v965 = vadd.f32 %v865, %v933
      %v966 = vadd.f32 %v866, %v934
      %v967 = vld [vmem:[#allocation2 + $0x2] sm:$0xff]
      %v968 = vld [vmem:[#allocation2 + $0xa] sm:$0xff]
      %v969 = vld [vmem:[#allocation2 + $0x1a] sm:$0xff]
      %v970 = vld [vmem:[#allocation2 + $0x22] sm:$0xff]
      %v971 = vld [vmem:[#allocation2 + $0x32] sm:$0xff]
      %v972 = vld [vmem:[#allocation2 + $0x3a] sm:$0xff]
      %v973 = vld [vmem:[#allocation2 + $0x4a] sm:$0xff]
      %v974 = vld [vmem:[#allocation2 + $0x52] sm:$0xff]
      %v975 = vld [vmem:[#allocation2 + $0x62] sm:$0xff]
      %v976 = vld [vmem:[#allocation2 + $0x6a] sm:$0xff]
      %v977 = vld [vmem:[#allocation2 + $0x7a] sm:$0xff]
      %v978 = vld [vmem:[#allocation2 + $0x82] sm:$0xff]
      %v979 = vld [vmem:[#allocation2 + $0x92] sm:$0xff]
      %v980 = vld [vmem:[#allocation2 + $0x9a] sm:$0xff]
      %v981 = vld [vmem:[#allocation2 + $0xaa] sm:$0xff]
      %v982 = vld [vmem:[#allocation2 + $0xb2] sm:$0xff]
      %v983 = vld [vmem:[#allocation2 + $0xc2] sm:$0xff]
      %v984 = vld [vmem:[#allocation2 + $0xca] sm:$0xff]
      %v985 = vld [vmem:[#allocation2 + $0xda] sm:$0xff]
      %v986 = vld [vmem:[#allocation2 + $0xe2] sm:$0xff]
      %v987 = vld [vmem:[#allocation2 + $0xf2] sm:$0xff]
      %v988 = vld [vmem:[#allocation2 + $0xfa] sm:$0xff]
      %v989 = vld [vmem:[#allocation2 + $0x10a] sm:$0xff]
      %v990 = vld [vmem:[#allocation2 + $0x112] sm:$0xff]
      %v991 = vld [vmem:[#allocation2 + $0x122] sm:$0xff]
      %v992 = vld [vmem:[#allocation2 + $0x12a] sm:$0xff]
      %v993 = vld [vmem:[#allocation2 + $0x13a] sm:$0xff]
      %v994 = vld [vmem:[#allocation2 + $0x142] sm:$0xff]
      %v995 = vld [vmem:[#allocation2 + $0x152] sm:$0xff]
      %v996 = vld [vmem:[#allocation2 + $0x15a] sm:$0xff]
      %v997 = vld [vmem:[#allocation2 + $0x16a] sm:$0xff]
      %v998 = vld [vmem:[#allocation2 + $0x172] sm:$0xff]
      %v999 = vlaneseq
      %v1000 = vshrl.u32 %v999, 7
      %v1001 = vsub.s32 2, %v1000
      %v1002 = vrot.slane %v797, %v1001
      %v1003 = vmul.f32 %v967, %v1002
      %v1004 = vmul.f32 %v968, %v1002
      %v1005 = vmul.f32 %v969, %v1002
      %v1006 = vmul.f32 %v970, %v1002
      %v1007 = vmul.f32 %v971, %v1002
      %v1008 = vmul.f32 %v972, %v1002
      %v1009 = vmul.f32 %v973, %v1002
      %v1010 = vmul.f32 %v974, %v1002
      %v1011 = vmul.f32 %v975, %v1002
      %v1012 = vmul.f32 %v976, %v1002
      %v1013 = vmul.f32 %v977, %v1002
      %v1014 = vmul.f32 %v978, %v1002
      %v1015 = vmul.f32 %v979, %v1002
      %v1016 = vmul.f32 %v980, %v1002
      %v1017 = vmul.f32 %v981, %v1002
      %v1018 = vmul.f32 %v982, %v1002
      %v1019 = vmul.f32 %v983, %v1002
      %v1020 = vmul.f32 %v984, %v1002
      %v1021 = vmul.f32 %v985, %v1002
      %v1022 = vmul.f32 %v986, %v1002
      %v1023 = vmul.f32 %v987, %v1002
      %v1024 = vmul.f32 %v988, %v1002
      %v1025 = vmul.f32 %v989, %v1002
      %v1026 = vmul.f32 %v990, %v1002
      %v1027 = vmul.f32 %v991, %v1002
      %v1028 = vmul.f32 %v992, %v1002
      %v1029 = vmul.f32 %v993, %v1002
      %v1030 = vmul.f32 %v994, %v1002
      %v1031 = vmul.f32 %v995, %v1002
      %v1032 = vmul.f32 %v996, %v1002
      %v1033 = vmul.f32 %v997, %v1002
      %v1034 = vmul.f32 %v998, %v1002
      %v1035 = vadd.f32 %v935, %v1003
      %v1036 = vadd.f32 %v936, %v1004
      %v1037 = vadd.f32 %v937, %v1005
      %v1038 = vadd.f32 %v938, %v1006
      %v1039 = vadd.f32 %v939, %v1007
      %v1040 = vadd.f32 %v940, %v1008
      %v1041 = vadd.f32 %v941, %v1009
      %v1042 = vadd.f32 %v942, %v1010
      %v1043 = vadd.f32 %v943, %v1011
      %v1044 = vadd.f32 %v944, %v1012
      %v1045 = vadd.f32 %v945, %v1013
      %v1046 = vadd.f32 %v946, %v1014
      %v1047 = vadd.f32 %v947, %v1015
      %v1048 = vadd.f32 %v948, %v1016
      %v1049 = vadd.f32 %v949, %v1017
      %v1050 = vadd.f32 %v950, %v1018
      %v1051 = vadd.f32 %v951, %v1019
      %v1052 = vadd.f32 %v952, %v1020
      %v1053 = vadd.f32 %v953, %v1021
      %v1054 = vadd.f32 %v954, %v1022
      %v1055 = vadd.f32 %v955, %v1023
      %v1056 = vadd.f32 %v956, %v1024
      %v1057 = vadd.f32 %v957, %v1025
      %v1058 = vadd.f32 %v958, %v1026
      %v1059 = vadd.f32 %v959, %v1027
      %v1060 = vadd.f32 %v960, %v1028
      %v1061 = vadd.f32 %v961, %v1029
      %v1062 = vadd.f32 %v962, %v1030
      %v1063 = vadd.f32 %v963, %v1031
      %v1064 = vadd.f32 %v964, %v1032
      %v1065 = vadd.f32 %v965, %v1033
      %v1066 = vadd.f32 %v966, %v1034
      %v1067 = vld [vmem:[%s764] sm:$0xff]
      %v1068 = vld [vmem:[%s764 + $0x8] sm:$0xff]
      %v1069 = vld [vmem:[%s764 + $0x18] sm:$0xff]
      %v1070 = vld [vmem:[%s764 + $0x20] sm:$0xff]
      %v1071 = vld [vmem:[%s764 + $0x30] sm:$0xff]
      %v1072 = vld [vmem:[%s764 + $0x38] sm:$0xff]
      %v1073 = vld [vmem:[%s764 + $0x48] sm:$0xff]
      %v1074 = vld [vmem:[%s764 + $0x50] sm:$0xff]
      %v1075 = vld [vmem:[%s764 + $0x60] sm:$0xff]
      %v1076 = vld [vmem:[%s764 + $0x68] sm:$0xff]
      %v1077 = vld [vmem:[%s764 + $0x78] sm:$0xff]
      %v1078 = vld [vmem:[%s764 + $0x80] sm:$0xff]
      %v1079 = vld [vmem:[%s764 + $0x90] sm:$0xff]
      %v1080 = vld [vmem:[%s764 + $0x98] sm:$0xff]
      %v1081 = vld [vmem:[%s764 + $0xa8] sm:$0xff]
      %v1082 = vld [vmem:[%s764 + $0xb0] sm:$0xff]
      %v1083 = vld [vmem:[%s764 + $0xc0] sm:$0xff]
      %v1084 = vld [vmem:[%s764 + $0xc8] sm:$0xff]
      %v1085 = vld [vmem:[%s764 + $0xd8] sm:$0xff]
      %v1086 = vld [vmem:[%s764 + $0xe0] sm:$0xff]
      %v1087 = vld [vmem:[%s764 + $0xf0] sm:$0xff]
      %v1088 = vld [vmem:[%s764 + $0xf8] sm:$0xff]
      %v1089 = vld [vmem:[%s764 + $0x108] sm:$0xff]
      %v1090 = vld [vmem:[%s764 + $0x110] sm:$0xff]
      %v1091 = vld [vmem:[%s764 + $0x120] sm:$0xff]
      %v1092 = vld [vmem:[%s764 + $0x128] sm:$0xff]
      %v1093 = vld [vmem:[%s764 + $0x138] sm:$0xff]
      %v1094 = vld [vmem:[%s764 + $0x140] sm:$0xff]
      %v1095 = vld [vmem:[%s764 + $0x150] sm:$0xff]
      %v1096 = vld [vmem:[%s764 + $0x158] sm:$0xff]
      %v1097 = vld [vmem:[%s764 + $0x168] sm:$0xff]
      %v1098 = vld [vmem:[%s764 + $0x170] sm:$0xff]
      %v1099 = vlaneseq
      %v1100 = vshrl.u32 %v1099, 7
      %v1101 = vsub.s32 3, %v1100
      %v1102 = vrot.slane %v797, %v1101
      %v1103 = vmul.f32 %v1067, %v1102
      %v1104 = vmul.f32 %v1068, %v1102
      %v1105 = vmul.f32 %v1069, %v1102
      %v1106 = vmul.f32 %v1070, %v1102
      %v1107 = vmul.f32 %v1071, %v1102
      %v1108 = vmul.f32 %v1072, %v1102
      %v1109 = vmul.f32 %v1073, %v1102
      %v1110 = vmul.f32 %v1074, %v1102
      %v1111 = vmul.f32 %v1075, %v1102
      %v1112 = vmul.f32 %v1076, %v1102
      %v1113 = vmul.f32 %v1077, %v1102
      %v1114 = vmul.f32 %v1078, %v1102
      %v1115 = vmul.f32 %v1079, %v1102
      %v1116 = vmul.f32 %v1080, %v1102
      %v1117 = vmul.f32 %v1081, %v1102
      %v1118 = vmul.f32 %v1082, %v1102
      %v1119 = vmul.f32 %v1083, %v1102
      %v1120 = vmul.f32 %v1084, %v1102
      %v1121 = vmul.f32 %v1085, %v1102
      %v1122 = vmul.f32 %v1086, %v1102
      %v1123 = vmul.f32 %v1087, %v1102
      %v1124 = vmul.f32 %v1088, %v1102
      %v1125 = vmul.f32 %v1089, %v1102
      %v1126 = vmul.f32 %v1090, %v1102
      %v1127 = vmul.f32 %v1091, %v1102
      %v1128 = vmul.f32 %v1092, %v1102
      %v1129 = vmul.f32 %v1093, %v1102
      %v1130 = vmul.f32 %v1094, %v1102
      %v1131 = vmul.f32 %v1095, %v1102
      %v1132 = vmul.f32 %v1096, %v1102
      %v1133 = vmul.f32 %v1097, %v1102
      %v1134 = vmul.f32 %v1098, %v1102
      %v1135 = vadd.f32 %v1035, %v1103
      %v1136 = vadd.f32 %v1036, %v1104
      %v1137 = vadd.f32 %v1037, %v1105
      %v1138 = vadd.f32 %v1038, %v1106
      %v1139 = vadd.f32 %v1039, %v1107
      %v1140 = vadd.f32 %v1040, %v1108
      %v1141 = vadd.f32 %v1041, %v1109
      %v1142 = vadd.f32 %v1042, %v1110
      %v1143 = vadd.f32 %v1043, %v1111
      %v1144 = vadd.f32 %v1044, %v1112
      %v1145 = vadd.f32 %v1045, %v1113
      %v1146 = vadd.f32 %v1046, %v1114
      %v1147 = vadd.f32 %v1047, %v1115
      %v1148 = vadd.f32 %v1048, %v1116
      %v1149 = vadd.f32 %v1049, %v1117
      %v1150 = vadd.f32 %v1050, %v1118
      %v1151 = vadd.f32 %v1051, %v1119
      %v1152 = vadd.f32 %v1052, %v1120
      %v1153 = vadd.f32 %v1053, %v1121
      %v1154 = vadd.f32 %v1054, %v1122
      %v1155 = vadd.f32 %v1055, %v1123
      %v1156 = vadd.f32 %v1056, %v1124
      %v1157 = vadd.f32 %v1057, %v1125
      %v1158 = vadd.f32 %v1058, %v1126
      %v1159 = vadd.f32 %v1059, %v1127
      %v1160 = vadd.f32 %v1060, %v1128
      %v1161 = vadd.f32 %v1061, %v1129
      %v1162 = vadd.f32 %v1062, %v1130
      %v1163 = vadd.f32 %v1063, %v1131
      %v1164 = vadd.f32 %v1064, %v1132
      %v1165 = vadd.f32 %v1065, %v1133
      %v1166 = vadd.f32 %v1066, %v1134
      %v1167 = vld [vmem:[%s764 + $0x1] sm:$0xff]
      %v1168 = vld [vmem:[%s764 + $0x9] sm:$0xff]
      %v1169 = vld [vmem:[%s764 + $0x19] sm:$0xff]
      %v1170 = vld [vmem:[%s764 + $0x21] sm:$0xff]
      %v1171 = vld [vmem:[%s764 + $0x31] sm:$0xff]
      %v1172 = vld [vmem:[%s764 + $0x39] sm:$0xff]
      %v1173 = vld [vmem:[%s764 + $0x49] sm:$0xff]
      %v1174 = vld [vmem:[%s764 + $0x51] sm:$0xff]
      %v1175 = vld [vmem:[%s764 + $0x61] sm:$0xff]
      %v1176 = vld [vmem:[%s764 + $0x69] sm:$0xff]
      %v1177 = vld [vmem:[%s764 + $0x79] sm:$0xff]
      %v1178 = vld [vmem:[%s764 + $0x81] sm:$0xff]
      %v1179 = vld [vmem:[%s764 + $0x91] sm:$0xff]
      %v1180 = vld [vmem:[%s764 + $0x99] sm:$0xff]
      %v1181 = vld [vmem:[%s764 + $0xa9] sm:$0xff]
      %v1182 = vld [vmem:[%s764 + $0xb1] sm:$0xff]
      %v1183 = vld [vmem:[%s764 + $0xc1] sm:$0xff]
      %v1184 = vld [vmem:[%s764 + $0xc9] sm:$0xff]
      %v1185 = vld [vmem:[%s764 + $0xd9] sm:$0xff]
      %v1186 = vld [vmem:[%s764 + $0xe1] sm:$0xff]
      %v1187 = vld [vmem:[%s764 + $0xf1] sm:$0xff]
      %v1188 = vld [vmem:[%s764 + $0xf9] sm:$0xff]
      %v1189 = vld [vmem:[%s764 + $0x109] sm:$0xff]
      %v1190 = vld [vmem:[%s764 + $0x111] sm:$0xff]
      %v1191 = vld [vmem:[%s764 + $0x121] sm:$0xff]
      %v1192 = vld [vmem:[%s764 + $0x129] sm:$0xff]
      %v1193 = vld [vmem:[%s764 + $0x139] sm:$0xff]
      %v1194 = vld [vmem:[%s764 + $0x141] sm:$0xff]
      %v1195 = vld [vmem:[%s764 + $0x151] sm:$0xff]
      %v1196 = vld [vmem:[%s764 + $0x159] sm:$0xff]
      %v1197 = vld [vmem:[%s764 + $0x169] sm:$0xff]
      %v1198 = vld [vmem:[%s764 + $0x171] sm:$0xff]
      %v1199 = vlaneseq
      %v1200 = vshrl.u32 %v1199, 7
      %v1201 = vsub.s32 4, %v1200
      %v1202 = vrot.slane %v797, %v1201
      %v1203 = vmul.f32 %v1167, %v1202
      %v1204 = vmul.f32 %v1168, %v1202
      %v1205 = vmul.f32 %v1169, %v1202
      %v1206 = vmul.f32 %v1170, %v1202
      %v1207 = vmul.f32 %v1171, %v1202
      %v1208 = vmul.f32 %v1172, %v1202
      %v1209 = vmul.f32 %v1173, %v1202
      %v1210 = vmul.f32 %v1174, %v1202
      %v1211 = vmul.f32 %v1175, %v1202
      %v1212 = vmul.f32 %v1176, %v1202
      %v1213 = vmul.f32 %v1177, %v1202
      %v1214 = vmul.f32 %v1178, %v1202
      %v1215 = vmul.f32 %v1179, %v1202
      %v1216 = vmul.f32 %v1180, %v1202
      %v1217 = vmul.f32 %v1181, %v1202
      %v1218 = vmul.f32 %v1182, %v1202
      %v1219 = vmul.f32 %v1183, %v1202
      %v1220 = vmul.f32 %v1184, %v1202
      %v1221 = vmul.f32 %v1185, %v1202
      %v1222 = vmul.f32 %v1186, %v1202
      %v1223 = vmul.f32 %v1187, %v1202
      %v1224 = vmul.f32 %v1188, %v1202
      %v1225 = vmul.f32 %v1189, %v1202
      %v1226 = vmul.f32 %v1190, %v1202
      %v1227 = vmul.f32 %v1191, %v1202
      %v1228 = vmul.f32 %v1192, %v1202
      %v1229 = vmul.f32 %v1193, %v1202
      %v1230 = vmul.f32 %v1194, %v1202
      %v1231 = vmul.f32 %v1195, %v1202
      %v1232 = vmul.f32 %v1196, %v1202
      %v1233 = vmul.f32 %v1197, %v1202
      %v1234 = vmul.f32 %v1198, %v1202
      %v1235 = vadd.f32 %v1135, %v1203
      %v1236 = vadd.f32 %v1136, %v1204
      %v1237 = vadd.f32 %v1137, %v1205
      %v1238 = vadd.f32 %v1138, %v1206
      %v1239 = vadd.f32 %v1139, %v1207
      %v1240 = vadd.f32 %v1140, %v1208
      %v1241 = vadd.f32 %v1141, %v1209
      %v1242 = vadd.f32 %v1142, %v1210
      %v1243 = vadd.f32 %v1143, %v1211
      %v1244 = vadd.f32 %v1144, %v1212
      %v1245 = vadd.f32 %v1145, %v1213
      %v1246 = vadd.f32 %v1146, %v1214
      %v1247 = vadd.f32 %v1147, %v1215
      %v1248 = vadd.f32 %v1148, %v1216
      %v1249 = vadd.f32 %v1149, %v1217
      %v1250 = vadd.f32 %v1150, %v1218
      %v1251 = vadd.f32 %v1151, %v1219
      %v1252 = vadd.f32 %v1152, %v1220
      %v1253 = vadd.f32 %v1153, %v1221
      %v1254 = vadd.f32 %v1154, %v1222
      %v1255 = vadd.f32 %v1155, %v1223
      %v1256 = vadd.f32 %v1156, %v1224
      %v1257 = vadd.f32 %v1157, %v1225
      %v1258 = vadd.f32 %v1158, %v1226
      %v1259 = vadd.f32 %v1159, %v1227
      %v1260 = vadd.f32 %v1160, %v1228
      %v1261 = vadd.f32 %v1161, %v1229
      %v1262 = vadd.f32 %v1162, %v1230
      %v1263 = vadd.f32 %v1163, %v1231
      %v1264 = vadd.f32 %v1164, %v1232
      %v1265 = vadd.f32 %v1165, %v1233
      %v1266 = vadd.f32 %v1166, %v1234
      %v1267 = vld [vmem:[%s764 + $0x2] sm:$0xff]
      %v1268 = vld [vmem:[%s764 + $0xa] sm:$0xff]
      %v1269 = vld [vmem:[%s764 + $0x1a] sm:$0xff]
      %v1270 = vld [vmem:[%s764 + $0x22] sm:$0xff]
      %v1271 = vld [vmem:[%s764 + $0x32] sm:$0xff]
      %v1272 = vld [vmem:[%s764 + $0x3a] sm:$0xff]
      %v1273 = vld [vmem:[%s764 + $0x4a] sm:$0xff]
      %v1274 = vld [vmem:[%s764 + $0x52] sm:$0xff]
      %v1275 = vld [vmem:[%s764 + $0x62] sm:$0xff]
      %v1276 = vld [vmem:[%s764 + $0x6a] sm:$0xff]
      %v1277 = vld [vmem:[%s764 + $0x7a] sm:$0xff]
      %v1278 = vld [vmem:[%s764 + $0x82] sm:$0xff]
      %v1279 = vld [vmem:[%s764 + $0x92] sm:$0xff]
      %v1280 = vld [vmem:[%s764 + $0x9a] sm:$0xff]
      %v1281 = vld [vmem:[%s764 + $0xaa] sm:$0xff]
      %v1282 = vld [vmem:[%s764 + $0xb2] sm:$0xff]
      %v1283 = vld [vmem:[%s764 + $0xc2] sm:$0xff]
      %v1284 = vld [vmem:[%s764 + $0xca] sm:$0xff]
      %v1285 = vld [vmem:[%s764 + $0xda] sm:$0xff]
      %v1286 = vld [vmem:[%s764 + $0xe2] sm:$0xff]
      %v1287 = vld [vmem:[%s764 + $0xf2] sm:$0xff]
      %v1288 = vld [vmem:[%s764 + $0xfa] sm:$0xff]
      %v1289 = vld [vmem:[%s764 + $0x10a] sm:$0xff]
      %v1290 = vld [vmem:[%s764 + $0x112] sm:$0xff]
      %v1291 = vld [vmem:[%s764 + $0x122] sm:$0xff]
      %v1292 = vld [vmem:[%s764 + $0x12a] sm:$0xff]
      %v1293 = vld [vmem:[%s764 + $0x13a] sm:$0xff]
      %v1294 = vld [vmem:[%s764 + $0x142] sm:$0xff]
      %v1295 = vld [vmem:[%s764 + $0x152] sm:$0xff]
      %v1296 = vld [vmem:[%s764 + $0x15a] sm:$0xff]
      %v1297 = vld [vmem:[%s764 + $0x16a] sm:$0xff]
      %v1298 = vld [vmem:[%s764 + $0x172] sm:$0xff]
      %v1299 = vlaneseq
      %v1300 = vshrl.u32 %v1299, 7
      %v1301 = vsub.s32 5, %v1300
      %v1302 = vrot.slane %v797, %v1301
      %v1303 = vmul.f32 %v1267, %v1302
      %v1304 = vmul.f32 %v1268, %v1302
      %v1305 = vmul.f32 %v1269, %v1302
      %v1306 = vmul.f32 %v1270, %v1302
      %v1307 = vmul.f32 %v1271, %v1302
      %v1308 = vmul.f32 %v1272, %v1302
      %v1309 = vmul.f32 %v1273, %v1302
      %v1310 = vmul.f32 %v1274, %v1302
      %v1311 = vmul.f32 %v1275, %v1302
      %v1312 = vmul.f32 %v1276, %v1302
      %v1313 = vmul.f32 %v1277, %v1302
      %v1314 = vmul.f32 %v1278, %v1302
      %v1315 = vmul.f32 %v1279, %v1302
      %v1316 = vmul.f32 %v1280, %v1302
      %v1317 = vmul.f32 %v1281, %v1302
      %v1318 = vmul.f32 %v1282, %v1302
      %v1319 = vmul.f32 %v1283, %v1302
      %v1320 = vmul.f32 %v1284, %v1302
      %v1321 = vmul.f32 %v1285, %v1302
      %v1322 = vmul.f32 %v1286, %v1302
      %v1323 = vmul.f32 %v1287, %v1302
      %v1324 = vmul.f32 %v1288, %v1302
      %v1325 = vmul.f32 %v1289, %v1302
      %v1326 = vmul.f32 %v1290, %v1302
      %v1327 = vmul.f32 %v1291, %v1302
      %v1328 = vmul.f32 %v1292, %v1302
      %v1329 = vmul.f32 %v1293, %v1302
      %v1330 = vmul.f32 %v1294, %v1302
      %v1331 = vmul.f32 %v1295, %v1302
      %v1332 = vmul.f32 %v1296, %v1302
      %v1333 = vmul.f32 %v1297, %v1302
      %v1334 = vmul.f32 %v1298, %v1302
      %v1335 = vadd.f32 %v1235, %v1303
      %v1336 = vadd.f32 %v1236, %v1304
      %v1337 = vadd.f32 %v1237, %v1305
      %v1338 = vadd.f32 %v1238, %v1306
      %v1339 = vadd.f32 %v1239, %v1307
      %v1340 = vadd.f32 %v1240, %v1308
      %v1341 = vadd.f32 %v1241, %v1309
      %v1342 = vadd.f32 %v1242, %v1310
      %v1343 = vadd.f32 %v1243, %v1311
      %v1344 = vadd.f32 %v1244, %v1312
      %v1345 = vadd.f32 %v1245, %v1313
      %v1346 = vadd.f32 %v1246, %v1314
      %v1347 = vadd.f32 %v1247, %v1315
      %v1348 = vadd.f32 %v1248, %v1316
      %v1349 = vadd.f32 %v1249, %v1317
      %v1350 = vadd.f32 %v1250, %v1318
      %v1351 = vadd.f32 %v1251, %v1319
      %v1352 = vadd.f32 %v1252, %v1320
      %v1353 = vadd.f32 %v1253, %v1321
      %v1354 = vadd.f32 %v1254, %v1322
      %v1355 = vadd.f32 %v1255, %v1323
      %v1356 = vadd.f32 %v1256, %v1324
      %v1357 = vadd.f32 %v1257, %v1325
      %v1358 = vadd.f32 %v1258, %v1326
      %v1359 = vadd.f32 %v1259, %v1327
      %v1360 = vadd.f32 %v1260, %v1328
      %v1361 = vadd.f32 %v1261, %v1329
      %v1362 = vadd.f32 %v1262, %v1330
      %v1363 = vadd.f32 %v1263, %v1331
      %v1364 = vadd.f32 %v1264, %v1332
      %v1365 = vadd.f32 %v1265, %v1333
      %v1366 = vadd.f32 %v1266, %v1334
      %s1367 = scalar_lea.vmem [#allocation2], 48
      %v1368 = vld [vmem:[%s1367] sm:$0xff]
      %v1369 = vld [vmem:[%s1367 + $0x8] sm:$0xff]
      %v1370 = vld [vmem:[%s1367 + $0x18] sm:$0xff]
      %v1371 = vld [vmem:[%s1367 + $0x20] sm:$0xff]
      %v1372 = vld [vmem:[%s1367 + $0x30] sm:$0xff]
      %v1373 = vld [vmem:[%s1367 + $0x38] sm:$0xff]
      %v1374 = vld [vmem:[%s1367 + $0x48] sm:$0xff]
      %v1375 = vld [vmem:[%s1367 + $0x50] sm:$0xff]
      %v1376 = vld [vmem:[%s1367 + $0x60] sm:$0xff]
      %v1377 = vld [vmem:[%s1367 + $0x68] sm:$0xff]
      %v1378 = vld [vmem:[%s1367 + $0x78] sm:$0xff]
      %v1379 = vld [vmem:[%s1367 + $0x80] sm:$0xff]
      %v1380 = vld [vmem:[%s1367 + $0x90] sm:$0xff]
      %v1381 = vld [vmem:[%s1367 + $0x98] sm:$0xff]
      %v1382 = vld [vmem:[%s1367 + $0xa8] sm:$0xff]
      %v1383 = vld [vmem:[%s1367 + $0xb0] sm:$0xff]
      %v1384 = vld [vmem:[%s1367 + $0xc0] sm:$0xff]
      %v1385 = vld [vmem:[%s1367 + $0xc8] sm:$0xff]
      %v1386 = vld [vmem:[%s1367 + $0xd8] sm:$0xff]
      %v1387 = vld [vmem:[%s1367 + $0xe0] sm:$0xff]
      %v1388 = vld [vmem:[%s1367 + $0xf0] sm:$0xff]
      %v1389 = vld [vmem:[%s1367 + $0xf8] sm:$0xff]
      %v1390 = vld [vmem:[%s1367 + $0x108] sm:$0xff]
      %v1391 = vld [vmem:[%s1367 + $0x110] sm:$0xff]
      %v1392 = vld [vmem:[%s1367 + $0x120] sm:$0xff]
      %v1393 = vld [vmem:[%s1367 + $0x128] sm:$0xff]
      %v1394 = vld [vmem:[%s1367 + $0x138] sm:$0xff]
      %v1395 = vld [vmem:[%s1367 + $0x140] sm:$0xff]
      %v1396 = vld [vmem:[%s1367 + $0x150] sm:$0xff]
      %v1397 = vld [vmem:[%s1367 + $0x158] sm:$0xff]
      %v1398 = vld [vmem:[%s1367 + $0x168] sm:$0xff]
      %v1399 = vld [vmem:[%s1367 + $0x170] sm:$0xff]
      %v1400 = vlaneseq
      %v1401 = vshrl.u32 %v1400, 7
      %v1402 = vsub.s32 6, %v1401
      %v1403 = vrot.slane %v797, %v1402
      %v1404 = vmul.f32 %v1368, %v1403
      %v1405 = vmul.f32 %v1369, %v1403
      %v1406 = vmul.f32 %v1370, %v1403
      %v1407 = vmul.f32 %v1371, %v1403
      %v1408 = vmul.f32 %v1372, %v1403
      %v1409 = vmul.f32 %v1373, %v1403
      %v1410 = vmul.f32 %v1374, %v1403
      %v1411 = vmul.f32 %v1375, %v1403
      %v1412 = vmul.f32 %v1376, %v1403
      %v1413 = vmul.f32 %v1377, %v1403
      %v1414 = vmul.f32 %v1378, %v1403
      %v1415 = vmul.f32 %v1379, %v1403
      %v1416 = vmul.f32 %v1380, %v1403
      %v1417 = vmul.f32 %v1381, %v1403
      %v1418 = vmul.f32 %v1382, %v1403
      %v1419 = vmul.f32 %v1383, %v1403
      %v1420 = vmul.f32 %v1384, %v1403
      %v1421 = vmul.f32 %v1385, %v1403
      %v1422 = vmul.f32 %v1386, %v1403
      %v1423 = vmul.f32 %v1387, %v1403
      %v1424 = vmul.f32 %v1388, %v1403
      %v1425 = vmul.f32 %v1389, %v1403
      %v1426 = vmul.f32 %v1390, %v1403
      %v1427 = vmul.f32 %v1391, %v1403
      %v1428 = vmul.f32 %v1392, %v1403
      %v1429 = vmul.f32 %v1393, %v1403
      %v1430 = vmul.f32 %v1394, %v1403
      %v1431 = vmul.f32 %v1395, %v1403
      %v1432 = vmul.f32 %v1396, %v1403
      %v1433 = vmul.f32 %v1397, %v1403
      %v1434 = vmul.f32 %v1398, %v1403
      %v1435 = vmul.f32 %v1399, %v1403
      %v1436 = vadd.f32 %v1335, %v1404
      %v1437 = vadd.f32 %v1336, %v1405
      %v1438 = vadd.f32 %v1337, %v1406
      %v1439 = vadd.f32 %v1338, %v1407
      %v1440 = vadd.f32 %v1339, %v1408
      %v1441 = vadd.f32 %v1340, %v1409
      %v1442 = vadd.f32 %v1341, %v1410
      %v1443 = vadd.f32 %v1342, %v1411
      %v1444 = vadd.f32 %v1343, %v1412
      %v1445 = vadd.f32 %v1344, %v1413
      %v1446 = vadd.f32 %v1345, %v1414
      %v1447 = vadd.f32 %v1346, %v1415
      %v1448 = vadd.f32 %v1347, %v1416
      %v1449 = vadd.f32 %v1348, %v1417
      %v1450 = vadd.f32 %v1349, %v1418
      %v1451 = vadd.f32 %v1350, %v1419
      %v1452 = vadd.f32 %v1351, %v1420
      %v1453 = vadd.f32 %v1352, %v1421
      %v1454 = vadd.f32 %v1353, %v1422
      %v1455 = vadd.f32 %v1354, %v1423
      %v1456 = vadd.f32 %v1355, %v1424
      %v1457 = vadd.f32 %v1356, %v1425
      %v1458 = vadd.f32 %v1357, %v1426
      %v1459 = vadd.f32 %v1358, %v1427
      %v1460 = vadd.f32 %v1359, %v1428
      %v1461 = vadd.f32 %v1360, %v1429
      %v1462 = vadd.f32 %v1361, %v1430
      %v1463 = vadd.f32 %v1362, %v1431
      %v1464 = vadd.f32 %v1363, %v1432
      %v1465 = vadd.f32 %v1364, %v1433
      %v1466 = vadd.f32 %v1365, %v1434
      %v1467 = vadd.f32 %v1366, %v1435
      %v1468 = vld [vmem:[%s1367 + $0x1] sm:$0xff]
      %v1469 = vld [vmem:[%s1367 + $0x9] sm:$0xff]
      %v1470 = vld [vmem:[%s1367 + $0x19] sm:$0xff]
      %v1471 = vld [vmem:[%s1367 + $0x21] sm:$0xff]
      %v1472 = vld [vmem:[%s1367 + $0x31] sm:$0xff]
      %v1473 = vld [vmem:[%s1367 + $0x39] sm:$0xff]
      %v1474 = vld [vmem:[%s1367 + $0x49] sm:$0xff]
      %v1475 = vld [vmem:[%s1367 + $0x51] sm:$0xff]
      %v1476 = vld [vmem:[%s1367 + $0x61] sm:$0xff]
      %v1477 = vld [vmem:[%s1367 + $0x69] sm:$0xff]
      %v1478 = vld [vmem:[%s1367 + $0x79] sm:$0xff]
      %v1479 = vld [vmem:[%s1367 + $0x81] sm:$0xff]
      %v1480 = vld [vmem:[%s1367 + $0x91] sm:$0xff]
      %v1481 = vld [vmem:[%s1367 + $0x99] sm:$0xff]
      %v1482 = vld [vmem:[%s1367 + $0xa9] sm:$0xff]
      %v1483 = vld [vmem:[%s1367 + $0xb1] sm:$0xff]
      %v1484 = vld [vmem:[%s1367 + $0xc1] sm:$0xff]
      %v1485 = vld [vmem:[%s1367 + $0xc9] sm:$0xff]
      %v1486 = vld [vmem:[%s1367 + $0xd9] sm:$0xff]
      %v1487 = vld [vmem:[%s1367 + $0xe1] sm:$0xff]
      %v1488 = vld [vmem:[%s1367 + $0xf1] sm:$0xff]
      %v1489 = vld [vmem:[%s1367 + $0xf9] sm:$0xff]
      %v1490 = vld [vmem:[%s1367 + $0x109] sm:$0xff]
      %v1491 = vld [vmem:[%s1367 + $0x111] sm:$0xff]
      %v1492 = vld [vmem:[%s1367 + $0x121] sm:$0xff]
      %v1493 = vld [vmem:[%s1367 + $0x129] sm:$0xff]
      %v1494 = vld [vmem:[%s1367 + $0x139] sm:$0xff]
      %v1495 = vld [vmem:[%s1367 + $0x141] sm:$0xff]
      %v1496 = vld [vmem:[%s1367 + $0x151] sm:$0xff]
      %v1497 = vld [vmem:[%s1367 + $0x159] sm:$0xff]
      %v1498 = vld [vmem:[%s1367 + $0x169] sm:$0xff]
      %v1499 = vld [vmem:[%s1367 + $0x171] sm:$0xff]
      %v1500 = vlaneseq
      %v1501 = vshrl.u32 %v1500, 7
      %v1502 = vsub.s32 7, %v1501
      %v1503 = vrot.slane %v797, %v1502
      %v1504 = vmul.f32 %v1468, %v1503
      %v1505 = vmul.f32 %v1469, %v1503
      %v1506 = vmul.f32 %v1470, %v1503
      %v1507 = vmul.f32 %v1471, %v1503
      %v1508 = vmul.f32 %v1472, %v1503
      %v1509 = vmul.f32 %v1473, %v1503
      %v1510 = vmul.f32 %v1474, %v1503
      %v1511 = vmul.f32 %v1475, %v1503
      %v1512 = vmul.f32 %v1476, %v1503
      %v1513 = vmul.f32 %v1477, %v1503
      %v1514 = vmul.f32 %v1478, %v1503
      %v1515 = vmul.f32 %v1479, %v1503
      %v1516 = vmul.f32 %v1480, %v1503
      %v1517 = vmul.f32 %v1481, %v1503
      %v1518 = vmul.f32 %v1482, %v1503
      %v1519 = vmul.f32 %v1483, %v1503
      %v1520 = vmul.f32 %v1484, %v1503
      %v1521 = vmul.f32 %v1485, %v1503
      %v1522 = vmul.f32 %v1486, %v1503
      %v1523 = vmul.f32 %v1487, %v1503
      %v1524 = vmul.f32 %v1488, %v1503
      %v1525 = vmul.f32 %v1489, %v1503
      %v1526 = vmul.f32 %v1490, %v1503
      %v1527 = vmul.f32 %v1491, %v1503
      %v1528 = vmul.f32 %v1492, %v1503
      %v1529 = vmul.f32 %v1493, %v1503
      %v1530 = vmul.f32 %v1494, %v1503
      %v1531 = vmul.f32 %v1495, %v1503
      %v1532 = vmul.f32 %v1496, %v1503
      %v1533 = vmul.f32 %v1497, %v1503
      %v1534 = vmul.f32 %v1498, %v1503
      %v1535 = vmul.f32 %v1499, %v1503
      %v1536 = vadd.f32 %v1436, %v1504
      %v1537 = vadd.f32 %v1437, %v1505
      %v1538 = vadd.f32 %v1438, %v1506
      %v1539 = vadd.f32 %v1439, %v1507
      %v1540 = vadd.f32 %v1440, %v1508
      %v1541 = vadd.f32 %v1441, %v1509
      %v1542 = vadd.f32 %v1442, %v1510
      %v1543 = vadd.f32 %v1443, %v1511
      %v1544 = vadd.f32 %v1444, %v1512
      %v1545 = vadd.f32 %v1445, %v1513
      %v1546 = vadd.f32 %v1446, %v1514
      %v1547 = vadd.f32 %v1447, %v1515
      %v1548 = vadd.f32 %v1448, %v1516
      %v1549 = vadd.f32 %v1449, %v1517
      %v1550 = vadd.f32 %v1450, %v1518
      %v1551 = vadd.f32 %v1451, %v1519
      %v1552 = vadd.f32 %v1452, %v1520
      %v1553 = vadd.f32 %v1453, %v1521
      %v1554 = vadd.f32 %v1454, %v1522
      %v1555 = vadd.f32 %v1455, %v1523
      %v1556 = vadd.f32 %v1456, %v1524
      %v1557 = vadd.f32 %v1457, %v1525
      %v1558 = vadd.f32 %v1458, %v1526
      %v1559 = vadd.f32 %v1459, %v1527
      %v1560 = vadd.f32 %v1460, %v1528
      %v1561 = vadd.f32 %v1461, %v1529
      %v1562 = vadd.f32 %v1462, %v1530
      %v1563 = vadd.f32 %v1463, %v1531
      %v1564 = vadd.f32 %v1464, %v1532
      %v1565 = vadd.f32 %v1465, %v1533
      %v1566 = vadd.f32 %v1466, %v1534
      %v1567 = vadd.f32 %v1467, %v1535
      %v1568 = vld [vmem:[%s1367 + $0x2] sm:$0xff]
      %v1569 = vld [vmem:[%s1367 + $0xa] sm:$0xff]
      %v1570 = vld [vmem:[%s1367 + $0x1a] sm:$0xff]
      %v1571 = vld [vmem:[%s1367 + $0x22] sm:$0xff]
      %v1572 = vld [vmem:[%s1367 + $0x32] sm:$0xff]
      %v1573 = vld [vmem:[%s1367 + $0x3a] sm:$0xff]
      %v1574 = vld [vmem:[%s1367 + $0x4a] sm:$0xff]
      %v1575 = vld [vmem:[%s1367 + $0x52] sm:$0xff]
      %v1576 = vld [vmem:[%s1367 + $0x62] sm:$0xff]
      %v1577 = vld [vmem:[%s1367 + $0x6a] sm:$0xff]
      %v1578 = vld [vmem:[%s1367 + $0x7a] sm:$0xff]
      %v1579 = vld [vmem:[%s1367 + $0x82] sm:$0xff]
      %v1580 = vld [vmem:[%s1367 + $0x92] sm:$0xff]
      %v1581 = vld [vmem:[%s1367 + $0x9a] sm:$0xff]
      %v1582 = vld [vmem:[%s1367 + $0xaa] sm:$0xff]
      %v1583 = vld [vmem:[%s1367 + $0xb2] sm:$0xff]
      %v1584 = vld [vmem:[%s1367 + $0xc2] sm:$0xff]
      %v1585 = vld [vmem:[%s1367 + $0xca] sm:$0xff]
      %v1586 = vld [vmem:[%s1367 + $0xda] sm:$0xff]
      %v1587 = vld [vmem:[%s1367 + $0xe2] sm:$0xff]
      %v1588 = vld [vmem:[%s1367 + $0xf2] sm:$0xff]
      %v1589 = vld [vmem:[%s1367 + $0xfa] sm:$0xff]
      %v1590 = vld [vmem:[%s1367 + $0x10a] sm:$0xff]
      %v1591 = vld [vmem:[%s1367 + $0x112] sm:$0xff]
      %v1592 = vld [vmem:[%s1367 + $0x122] sm:$0xff]
      %v1593 = vld [vmem:[%s1367 + $0x12a] sm:$0xff]
      %v1594 = vld [vmem:[%s1367 + $0x13a] sm:$0xff]
      %v1595 = vld [vmem:[%s1367 + $0x142] sm:$0xff]
      %v1596 = vld [vmem:[%s1367 + $0x152] sm:$0xff]
      %v1597 = vld [vmem:[%s1367 + $0x15a] sm:$0xff]
      %v1598 = vld [vmem:[%s1367 + $0x16a] sm:$0xff]
      %v1599 = vld [vmem:[%s1367 + $0x172] sm:$0xff]
      %v1600 = vlaneseq
      %v1601 = vshrl.u32 %v1600, 7
      %v1602 = vsub.s32 0, %v1601
      %v1603 = vrot.slane %v798, %v1602
      %v1604 = vmul.f32 %v1568, %v1603
      %v1605 = vmul.f32 %v1569, %v1603
      %v1606 = vmul.f32 %v1570, %v1603
      %v1607 = vmul.f32 %v1571, %v1603
      %v1608 = vmul.f32 %v1572, %v1603
      %v1609 = vmul.f32 %v1573, %v1603
      %v1610 = vmul.f32 %v1574, %v1603
      %v1611 = vmul.f32 %v1575, %v1603
      %v1612 = vmul.f32 %v1576, %v1603
      %v1613 = vmul.f32 %v1577, %v1603
      %v1614 = vmul.f32 %v1578, %v1603
      %v1615 = vmul.f32 %v1579, %v1603
      %v1616 = vmul.f32 %v1580, %v1603
      %v1617 = vmul.f32 %v1581, %v1603
      %v1618 = vmul.f32 %v1582, %v1603
      %v1619 = vmul.f32 %v1583, %v1603
      %v1620 = vmul.f32 %v1584, %v1603
      %v1621 = vmul.f32 %v1585, %v1603
      %v1622 = vmul.f32 %v1586, %v1603
      %v1623 = vmul.f32 %v1587, %v1603
      %v1624 = vmul.f32 %v1588, %v1603
      %v1625 = vmul.f32 %v1589, %v1603
      %v1626 = vmul.f32 %v1590, %v1603
      %v1627 = vmul.f32 %v1591, %v1603
      %v1628 = vmul.f32 %v1592, %v1603
      %v1629 = vmul.f32 %v1593, %v1603
      %v1630 = vmul.f32 %v1594, %v1603
      %v1631 = vmul.f32 %v1595, %v1603
      %v1632 = vmul.f32 %v1596, %v1603
      %v1633 = vmul.f32 %v1597, %v1603
      %v1634 = vmul.f32 %v1598, %v1603
      %v1635 = vmul.f32 %v1599, %v1603
      %v1636 = vadd.f32 %v1536, %v1604
      %v1637 = vadd.f32 %v1537, %v1605
      %v1638 = vadd.f32 %v1538, %v1606
      %v1639 = vadd.f32 %v1539, %v1607
      %v1640 = vadd.f32 %v1540, %v1608
      %v1641 = vadd.f32 %v1541, %v1609
      %v1642 = vadd.f32 %v1542, %v1610
      %v1643 = vadd.f32 %v1543, %v1611
      %v1644 = vadd.f32 %v1544, %v1612
      %v1645 = vadd.f32 %v1545, %v1613
      %v1646 = vadd.f32 %v1546, %v1614
      %v1647 = vadd.f32 %v1547, %v1615
      %v1648 = vadd.f32 %v1548, %v1616
      %v1649 = vadd.f32 %v1549, %v1617
      %v1650 = vadd.f32 %v1550, %v1618
      %v1651 = vadd.f32 %v1551, %v1619
      %v1652 = vadd.f32 %v1552, %v1620
      %v1653 = vadd.f32 %v1553, %v1621
      %v1654 = vadd.f32 %v1554, %v1622
      %v1655 = vadd.f32 %v1555, %v1623
      %v1656 = vadd.f32 %v1556, %v1624
      %v1657 = vadd.f32 %v1557, %v1625
      %v1658 = vadd.f32 %v1558, %v1626
      %v1659 = vadd.f32 %v1559, %v1627
      %v1660 = vadd.f32 %v1560, %v1628
      %v1661 = vadd.f32 %v1561, %v1629
      %v1662 = vadd.f32 %v1562, %v1630
      %v1663 = vadd.f32 %v1563, %v1631
      %v1664 = vadd.f32 %v1564, %v1632
      %v1665 = vadd.f32 %v1565, %v1633
      %v1666 = vadd.f32 %v1566, %v1634
      %v1667 = vadd.f32 %v1567, %v1635
      %v1668 = vld [vmem:[%s4] sm:$0x1]
      %v1670 = vlaneseq
      %v1671 = vshrl.u32 %v1670, 7
      %v1672 = vsub.s32 0, %v1671
      %v1673 = vrot.slane %v1668, %v1672
      %v1675 = vadd.f32 %v1636, %v1673
      %v1676 = vadd.f32 %v1637, %v1673
      %v1677 = vadd.f32 %v1638, %v1673
      %v1678 = vadd.f32 %v1639, %v1673
      %v1679 = vadd.f32 %v1640, %v1673
      %v1680 = vadd.f32 %v1641, %v1673
      %v1681 = vadd.f32 %v1642, %v1673
      %v1682 = vadd.f32 %v1643, %v1673
      %v1683 = vadd.f32 %v1644, %v1673
      %v1684 = vadd.f32 %v1645, %v1673
      %v1685 = vadd.f32 %v1646, %v1673
      %v1686 = vadd.f32 %v1647, %v1673
      %v1687 = vadd.f32 %v1648, %v1673
      %v1688 = vadd.f32 %v1649, %v1673
      %v1689 = vadd.f32 %v1650, %v1673
      %v1690 = vadd.f32 %v1651, %v1673
      %v1691 = vadd.f32 %v1652, %v1673
      %v1692 = vadd.f32 %v1653, %v1673
      %v1693 = vadd.f32 %v1654, %v1673
      %v1694 = vadd.f32 %v1655, %v1673
      %v1695 = vadd.f32 %v1656, %v1673
      %v1696 = vadd.f32 %v1657, %v1673
      %v1697 = vadd.f32 %v1658, %v1673
      %v1698 = vadd.f32 %v1659, %v1673
      %v1699 = vadd.f32 %v1660, %v1673
      %v1700 = vadd.f32 %v1661, %v1673
      %v1701 = vadd.f32 %v1662, %v1673
      %v1702 = vadd.f32 %v1663, %v1673
      %v1703 = vadd.f32 %v1664, %v1673
      %v1704 = vadd.f32 %v1665, %v1673
      %v1705 = vadd.f32 %v1666, %v1673
      %v1706 = vadd.f32 %v1667, %v1673
      %v1707 = vmax.f32 %v1675, 0.0
      %v1708 = vmax.f32 %v1676, 0.0
      %v1709 = vmax.f32 %v1677, 0.0
      %v1710 = vmax.f32 %v1678, 0.0
      %v1711 = vmax.f32 %v1679, 0.0
      %v1712 = vmax.f32 %v1680, 0.0
      %v1713 = vmax.f32 %v1681, 0.0
      %v1714 = vmax.f32 %v1682, 0.0
      %v1715 = vmax.f32 %v1683, 0.0
      %v1716 = vmax.f32 %v1684, 0.0
      %v1717 = vmax.f32 %v1685, 0.0
      %v1718 = vmax.f32 %v1686, 0.0
      %v1719 = vmax.f32 %v1687, 0.0
      %v1720 = vmax.f32 %v1688, 0.0
      %v1721 = vmax.f32 %v1689, 0.0
      %v1722 = vmax.f32 %v1690, 0.0
      %v1723 = vmax.f32 %v1691, 0.0
      %v1724 = vmax.f32 %v1692, 0.0
      %v1725 = vmax.f32 %v1693, 0.0
      %v1726 = vmax.f32 %v1694, 0.0
      %v1727 = vmax.f32 %v1695, 0.0
      %v1728 = vmax.f32 %v1696, 0.0
      %v1729 = vmax.f32 %v1697, 0.0
      %v1730 = vmax.f32 %v1698, 0.0
      %v1731 = vmax.f32 %v1699, 0.0
      %v1732 = vmax.f32 %v1700, 0.0
      %v1733 = vmax.f32 %v1701, 0.0
      %v1734 = vmax.f32 %v1702, 0.0
      %v1735 = vmax.f32 %v1703, 0.0
      %v1736 = vmax.f32 %v1704, 0.0
      %v1737 = vmax.f32 %v1705, 0.0
      %v1738 = vmax.f32 %v1706, 0.0
      %v1739 = vmin.f32 %v1707, 6.0
      %v1740 = vmin.f32 %v1708, 6.0
      %v1741 = vmin.f32 %v1709, 6.0
      %v1742 = vmin.f32 %v1710, 6.0
      %v1743 = vmin.f32 %v1711, 6.0
      %v1744 = vmin.f32 %v1712, 6.0
      %v1745 = vmin.f32 %v1713, 6.0
      %v1746 = vmin.f32 %v1714, 6.0
      %v1747 = vmin.f32 %v1715, 6.0
      %v1748 = vmin.f32 %v1716, 6.0
      %v1749 = vmin.f32 %v1717, 6.0
      %v1750 = vmin.f32 %v1718, 6.0
      %v1751 = vmin.f32 %v1719, 6.0
      %v1752 = vmin.f32 %v1720, 6.0
      %v1753 = vmin.f32 %v1721, 6.0
      %v1754 = vmin.f32 %v1722, 6.0
      %v1755 = vmin.f32 %v1723, 6.0
      %v1756 = vmin.f32 %v1724, 6.0
      %v1757 = vmin.f32 %v1725, 6.0
      %v1758 = vmin.f32 %v1726, 6.0
      %v1759 = vmin.f32 %v1727, 6.0
      %v1760 = vmin.f32 %v1728, 6.0
      %v1761 = vmin.f32 %v1729, 6.0
      %v1762 = vmin.f32 %v1730, 6.0
      %v1763 = vmin.f32 %v1731, 6.0
      %v1764 = vmin.f32 %v1732, 6.0
      %v1765 = vmin.f32 %v1733, 6.0
      %v1766 = vmin.f32 %v1734, 6.0
      %v1767 = vmin.f32 %v1735, 6.0
      %v1768 = vmin.f32 %v1736, 6.0
      %v1769 = vmin.f32 %v1737, 6.0
      %v1770 = vmin.f32 %v1738, 6.0
      %v1771 = vld [vmem:[%s5] sm:$0xff]
      %v1772 = vld [vmem:[%s5 + $0x8] sm:$0xff]
      %v1773 = vld [vmem:[%s5 + $0x10] sm:$0xff]
      %v1774 = vld [vmem:[%s6] sm:$0x1]
      %v1776 = vlaneseq
      %v1777 = vshrl.u32 %v1776, 7
      %v1778 = vsub.s32 0, %v1777
      %v1779 = vrot.slane %v1774, %v1778
      %v1782 = vsel %vm709, %v1739, 0
      %v1785 = vsel %vm709, %v1740, 0
      %v1788 = vsel %vm709, %v1741, 0
      %v1791 = vsel %vm709, %v1742, 0
      %v1794 = vsel %vm709, %v1743, 0
      %v1797 = vsel %vm709, %v1744, 0
      %v1800 = vsel %vm709, %v1745, 0
      %v1803 = vsel %vm709, %v1746, 0
      %v1806 = vsel %vm709, %v1747, 0
      %v1809 = vsel %vm709, %v1748, 0
      %v1812 = vsel %vm709, %v1749, 0
      %v1815 = vsel %vm709, %v1750, 0
      %v1818 = vsel %vm709, %v1751, 0
      %v1821 = vsel %vm709, %v1752, 0
      %v1824 = vsel %vm709, %v1753, 0
      %v1827 = vsel %vm709, %v1754, 0
      %v1830 = vsel %vm709, %v1755, 0
      %v1833 = vsel %vm709, %v1756, 0
      %v1836 = vsel %vm709, %v1757, 0
      %v1839 = vsel %vm709, %v1758, 0
      %v1842 = vsel %vm709, %v1759, 0
      %v1845 = vsel %vm709, %v1760, 0
      %v1848 = vsel %vm709, %v1761, 0
      %v1851 = vsel %vm709, %v1762, 0
      %v1854 = vsel %vm709, %v1763, 0
      %v1857 = vsel %vm709, %v1764, 0
      %v1860 = vsel %vm709, %v1765, 0
      %v1863 = vsel %vm709, %v1766, 0
      %v1866 = vsel %vm709, %v1767, 0
      %v1869 = vsel %vm709, %v1768, 0
      %v1872 = vsel %vm709, %v1769, 0
      %v1875 = vsel %vm709, %v1770, 0
      %1877 = vmatprep.subr.mxu0 0.0
      %1878 = vmatpush1.msra.mxu0 %v1771
      %1879 = vmatprep.subr.mxu0 0.0
      %1880 = vmatpush1.msra.mxu0 %v1772
      %1881 = vmatprep.subr.mxu0 0.0
      %1882 = vmatpush1.msra.mxu0 %v1773
      %1883 = vmatprep.subr.mxu0 0.0
      %1884 = vmatpush1.msra.mxu0 0.0
      %1885 = vmatprep.subr.mxu0 0.0
      %1886 = vmatpush1.msra.mxu0 0.0
      %1887 = vmatprep.subr.mxu0 0.0
      %1888 = vmatpush1.msra.mxu0 0.0
      %1889 = vmatprep.subr.mxu0 0.0
      %1890 = vmatpush1.msra.mxu0 0.0
      %1891 = vmatprep.subr.mxu0 0.0
      %1892 = vmatpush1.msra.mxu0 0.0
      %1893 = vmatprep.subr.mxu0 0.0
      %1894 = vmatpush1.msra.mxu0 0.0
      %1895 = vmatprep.subr.mxu0 0.0
      %1896 = vmatpush1.msra.mxu0 0.0
      %1897 = vmatprep.subr.mxu0 0.0
      %1898 = vmatpush1.msra.mxu0 0.0
      %1899 = vmatprep.subr.mxu0 0.0
      %1900 = vmatpush1.msra.mxu0 0.0
      %1901 = vmatprep.subr.mxu0 0.0
      %1902 = vmatpush1.msra.mxu0 0.0
      %1903 = vmatprep.subr.mxu0 0.0
      %1904 = vmatpush1.msra.mxu0 0.0
      %1905 = vmatprep.subr.mxu0 0.0
      %1906 = vmatpush1.msra.mxu0 0.0
      %1907 = vmatprep.subr.mxu0 0.0
      %1908 = vmatpush1.msra.mxu0 0.0
      %1909 = vmatprep.subr.mxu0 0.0
      %1910 = vmatpush1.msra.mxu0 0.0
      %1911 = vmatprep.subr.mxu0 0.0
      %1912 = vmatpush1.msra.mxu0 0.0
      %1913 = vmatprep.subr.mxu0 0.0
      %1914 = vmatpush1.msra.mxu0 0.0
      %1915 = vmatprep.subr.mxu0 0.0
      %1916 = vmatpush1.msra.mxu0 0.0
      %1917 = vmatprep.subr.mxu0 0.0
      %1918 = vmatpush1.msra.mxu0 0.0
      %1919 = vmatprep.subr.mxu0 0.0
      %1920 = vmatpush1.msra.mxu0 0.0
      %1921 = vmatprep.subr.mxu0 0.0
      %1922 = vmatpush1.msra.mxu0 0.0
      %1923 = vmatprep.subr.mxu0 0.0
      %1924 = vmatpush1.msra.mxu0 0.0
      %1925 = vmatprep.subr.mxu0 0.0
      %1926 = vmatpush1.msra.mxu0 0.0
      %1927 = vmatprep.subr.mxu0 0.0
      %1928 = vmatpush1.msra.mxu0 0.0
      %1929 = vmatprep.subr.mxu0 0.0
      %1930 = vmatpush1.msra.mxu0 0.0
      %1931 = vmatprep.subr.mxu0 0.0
      %1932 = vmatpush1.msra.mxu0 0.0
      %1933 = vmatprep.subr.mxu0 0.0
      %1934 = vmatpush1.msra.mxu0 0.0
      %1935 = vmatprep.subr.mxu0 0.0
      %1936 = vmatpush1.msra.mxu0 0.0
      %1937 = vmatprep.subr.mxu0 0.0
      %1938 = vmatpush1.msra.mxu0 0.0
      %1939 = vmatprep.subr.mxu0 0.0
      %1940 = vmatpush1.msra.mxu0 0.0
      %1941 = vmatprep.mubr.f32.mxu0 0.0
      %1942 = vmatmul.mubr.f32.gmra.mrb[0].mxu0 %v1782
      %v1943 = vpop.f32.mrb[0].mxu0
      %v1944 = vadd.f32 %v1779, %v1943
      %v1945 = vpop.f32.mrb[0].mxu0
      %1946 = vmatprep.mubr.f32.mxu0 0.0
      %1947 = vmatmul.mubr.f32.gmra.mrb[0].mxu0 %v1785
      %v1948 = vpop.f32.mrb[0].mxu0
      %v1949 = vadd.f32 %v1779, %v1948
      %v1950 = vpop.f32.mrb[0].mxu0
      %1951 = vmatprep.mubr.f32.mxu0 0.0
      %1952 = vmatmul.mubr.f32.gmra.mrb[0].mxu0 %v1788
      %v1953 = vpop.f32.mrb[0].mxu0
      %v1954 = vadd.f32 %v1779, %v1953
      %v1955 = vpop.f32.mrb[0].mxu0
      %1956 = vmatprep.mubr.f32.mxu0 0.0
      %1957 = vmatmul.mubr.f32.gmra.mrb[0].mxu0 %v1791
      %v1958 = vpop.f32.mrb[0].mxu0
      %v1959 = vadd.f32 %v1779, %v1958
      %v1960 = vpop.f32.mrb[0].mxu0
      %1961 = vmatprep.mubr.f32.mxu0 0.0
      %1962 = vmatmul.mubr.f32.gmra.mrb[0].mxu0 %v1794
      %v1963 = vpop.f32.mrb[0].mxu0
      %v1964 = vadd.f32 %v1779, %v1963
      %v1965 = vpop.f32.mrb[0].mxu0
      %1966 = vmatprep.mubr.f32.mxu0 0.0
      %1967 = vmatmul.mubr.f32.gmra.mrb[0].mxu0 %v1797
      %v1968 = vpop.f32.mrb[0].mxu0
      %v1969 = vadd.f32 %v1779, %v1968
      %v1970 = vpop.f32.mrb[0].mxu0
      %1971 = vmatprep.mubr.f32.mxu0 0.0
      %1972 = vmatmul.mubr.f32.gmra.mrb[0].mxu0 %v1800
      %v1973 = vpop.f32.mrb[0].mxu0
      %v1974 = vadd.f32 %v1779, %v1973
      %v1975 = vpop.f32.mrb[0].mxu0
      %1976 = vmatprep.mubr.f32.mxu0 0.0
      %1977 = vmatmul.mubr.f32.gmra.mrb[0].mxu0 %v1803
      %v1978 = vpop.f32.mrb[0].mxu0
      %v1979 = vadd.f32 %v1779, %v1978
      %v1980 = vpop.f32.mrb[0].mxu0
      %1981 = vmatprep.mubr.f32.mxu0 0.0
      %1982 = vmatmul.mubr.f32.gmra.mrb[0].mxu0 %v1806
      %v1983 = vpop.f32.mrb[0].mxu0
      %v1984 = vadd.f32 %v1779, %v1983
      %v1985 = vpop.f32.mrb[0].mxu0
      %1986 = vmatprep.mubr.f32.mxu0 0.0
      %1987 = vmatmul.mubr.f32.gmra.mrb[0].mxu0 %v1809
      %v1988 = vpop.f32.mrb[0].mxu0
      %v1989 = vadd.f32 %v1779, %v1988
      %v1990 = vpop.f32.mrb[0].mxu0
      %1991 = vmatprep.mubr.f32.mxu0 0.0
      %1992 = vmatmul.mubr.f32.gmra.mrb[0].mxu0 %v1812
      %v1993 = vpop.f32.mrb[0].mxu0
      %v1994 = vadd.f32 %v1779, %v1993
      %v1995 = vpop.f32.mrb[0].mxu0
      %1996 = vmatprep.mubr.f32.mxu0 0.0
      %1997 = vmatmul.mubr.f32.gmra.mrb[0].mxu0 %v1815
      %v1998 = vpop.f32.mrb[0].mxu0
      %v1999 = vadd.f32 %v1779, %v1998
      %v2000 = vpop.f32.mrb[0].mxu0
      %2001 = vmatprep.mubr.f32.mxu0 0.0
      %2002 = vmatmul.mubr.f32.gmra.mrb[0].mxu0 %v1818
      %v2003 = vpop.f32.mrb[0].mxu0
      %v2004 = vadd.f32 %v1779, %v2003
      %v2005 = vpop.f32.mrb[0].mxu0
      %2006 = vmatprep.mubr.f32.mxu0 0.0
      %2007 = vmatmul.mubr.f32.gmra.mrb[0].mxu0 %v1821
      %v2008 = vpop.f32.mrb[0].mxu0
      %v2009 = vadd.f32 %v1779, %v2008
      %v2010 = vpop.f32.mrb[0].mxu0
      %2011 = vmatprep.mubr.f32.mxu0 0.0
      %2012 = vmatmul.mubr.f32.gmra.mrb[0].mxu0 %v1824
      %v2013 = vpop.f32.mrb[0].mxu0
      %v2014 = vadd.f32 %v1779, %v2013
      %v2015 = vpop.f32.mrb[0].mxu0
      %2016 = vmatprep.mubr.f32.mxu0 0.0
      %2017 = vmatmul.mubr.f32.gmra.mrb[0].mxu0 %v1827
      %v2018 = vpop.f32.mrb[0].mxu0
      %v2019 = vadd.f32 %v1779, %v2018
      %v2020 = vpop.f32.mrb[0].mxu0
      %2021 = vmatprep.mubr.f32.mxu0 0.0
      %2022 = vmatmul.mubr.f32.gmra.mrb[0].mxu0 %v1830
      %v2023 = vpop.f32.mrb[0].mxu0
      %v2024 = vadd.f32 %v1779, %v2023
      %v2025 = vpop.f32.mrb[0].mxu0
      %2026 = vmatprep.mubr.f32.mxu0 0.0
      %2027 = vmatmul.mubr.f32.gmra.mrb[0].mxu0 %v1833
      %v2028 = vpop.f32.mrb[0].mxu0
      %v2029 = vadd.f32 %v1779, %v2028
      %v2030 = vpop.f32.mrb[0].mxu0
      %2031 = vmatprep.mubr.f32.mxu0 0.0
      %2032 = vmatmul.mubr.f32.gmra.mrb[0].mxu0 %v1836
      %v2033 = vpop.f32.mrb[0].mxu0
      %v2034 = vadd.f32 %v1779, %v2033
      %v2035 = vpop.f32.mrb[0].mxu0
      %2036 = vmatprep.mubr.f32.mxu0 0.0
      %2037 = vmatmul.mubr.f32.gmra.mrb[0].mxu0 %v1839
      %v2038 = vpop.f32.mrb[0].mxu0
      %v2039 = vadd.f32 %v1779, %v2038
      %v2040 = vpop.f32.mrb[0].mxu0
      %2041 = vmatprep.mubr.f32.mxu0 0.0
      %2042 = vmatmul.mubr.f32.gmra.mrb[0].mxu0 %v1842
      %v2043 = vpop.f32.mrb[0].mxu0
      %v2044 = vadd.f32 %v1779, %v2043
      %v2045 = vpop.f32.mrb[0].mxu0
      %2046 = vmatprep.mubr.f32.mxu0 0.0
      %2047 = vmatmul.mubr.f32.gmra.mrb[0].mxu0 %v1845
      %v2048 = vpop.f32.mrb[0].mxu0
      %v2049 = vadd.f32 %v1779, %v2048
      %v2050 = vpop.f32.mrb[0].mxu0
      %2051 = vmatprep.mubr.f32.mxu0 0.0
      %2052 = vmatmul.mubr.f32.gmra.mrb[0].mxu0 %v1848
      %v2053 = vpop.f32.mrb[0].mxu0
      %v2054 = vadd.f32 %v1779, %v2053
      %v2055 = vpop.f32.mrb[0].mxu0
      %2056 = vmatprep.mubr.f32.mxu0 0.0
      %2057 = vmatmul.mubr.f32.gmra.mrb[0].mxu0 %v1851
      %v2058 = vpop.f32.mrb[0].mxu0
      %v2059 = vadd.f32 %v1779, %v2058
      %v2060 = vpop.f32.mrb[0].mxu0
      %2061 = vmatprep.mubr.f32.mxu0 0.0
      %2062 = vmatmul.mubr.f32.gmra.mrb[0].mxu0 %v1854
      %v2063 = vpop.f32.mrb[0].mxu0
      %v2064 = vadd.f32 %v1779, %v2063
      %v2065 = vpop.f32.mrb[0].mxu0
      %2066 = vmatprep.mubr.f32.mxu0 0.0
      %2067 = vmatmul.mubr.f32.gmra.mrb[0].mxu0 %v1857
      %v2068 = vpop.f32.mrb[0].mxu0
      %v2069 = vadd.f32 %v1779, %v2068
      %v2070 = vpop.f32.mrb[0].mxu0
      %2071 = vmatprep.mubr.f32.mxu0 0.0
      %2072 = vmatmul.mubr.f32.gmra.mrb[0].mxu0 %v1860
      %v2073 = vpop.f32.mrb[0].mxu0
      %v2074 = vadd.f32 %v1779, %v2073
      %v2075 = vpop.f32.mrb[0].mxu0
      %2076 = vmatprep.mubr.f32.mxu0 0.0
      %2077 = vmatmul.mubr.f32.gmra.mrb[0].mxu0 %v1863
      %v2078 = vpop.f32.mrb[0].mxu0
      %v2079 = vadd.f32 %v1779, %v2078
      %v2080 = vpop.f32.mrb[0].mxu0
      %2081 = vmatprep.mubr.f32.mxu0 0.0
      %2082 = vmatmul.mubr.f32.gmra.mrb[0].mxu0 %v1866
      %v2083 = vpop.f32.mrb[0].mxu0
      %v2084 = vadd.f32 %v1779, %v2083
      %v2085 = vpop.f32.mrb[0].mxu0
      %2086 = vmatprep.mubr.f32.mxu0 0.0
      %2087 = vmatmul.mubr.f32.gmra.mrb[0].mxu0 %v1869
      %v2088 = vpop.f32.mrb[0].mxu0
      %v2089 = vadd.f32 %v1779, %v2088
      %v2090 = vpop.f32.mrb[0].mxu0
      %2091 = vmatprep.mubr.f32.mxu0 0.0
      %2092 = vmatmul.mubr.f32.gmra.mrb[0].mxu0 %v1872
      %v2093 = vpop.f32.mrb[0].mxu0
      %v2094 = vadd.f32 %v1779, %v2093
      %v2095 = vpop.f32.mrb[0].mxu0
      %2096 = vmatprep.mubr.f32.mxu0 0.0
      %2097 = vmatmul.mubr.f32.gmra.mrb[0].mxu0 %v1875
      %v2098 = vpop.f32.mrb[0].mxu0
      %v2099 = vadd.f32 %v1779, %v2098
      %v2100 = vpop.f32.mrb[0].mxu0
      %2101 = vdwg.mxu0
      %v2102 = vadd.f32 %v1944, %v279
      %v2103 = vadd.f32 %v1949, %v280
      %v2104 = vadd.f32 %v1954, %v281
      %v2105 = vadd.f32 %v1959, %v282
      %v2106 = vadd.f32 %v1964, %v283
      %v2107 = vadd.f32 %v1969, %v284
      %v2108 = vadd.f32 %v1974, %v285
      %v2109 = vadd.f32 %v1979, %v286
      %v2110 = vadd.f32 %v1984, %v287
      %v2111 = vadd.f32 %v1989, %v288
      %v2112 = vadd.f32 %v1994, %v289
      %v2113 = vadd.f32 %v1999, %v290
      %v2114 = vadd.f32 %v2004, %v291
      %v2115 = vadd.f32 %v2009, %v292
      %v2116 = vadd.f32 %v2014, %v293
      %v2117 = vadd.f32 %v2019, %v294
      %v2118 = vadd.f32 %v2024, %v295
      %v2119 = vadd.f32 %v2029, %v296
      %v2120 = vadd.f32 %v2034, %v297
      %v2121 = vadd.f32 %v2039, %v298
      %v2122 = vadd.f32 %v2044, %v299
      %v2123 = vadd.f32 %v2049, %v300
      %v2124 = vadd.f32 %v2054, %v301
      %v2125 = vadd.f32 %v2059, %v302
      %v2126 = vadd.f32 %v2064, %v303
      %v2127 = vadd.f32 %v2069, %v304
      %v2128 = vadd.f32 %v2074, %v305
      %v2129 = vadd.f32 %v2079, %v306
      %v2130 = vadd.f32 %v2084, %v307
      %v2131 = vadd.f32 %v2089, %v308
      %v2132 = vadd.f32 %v2094, %v309
      %v2133 = vadd.f32 %v2099, %v310
      %2134 = vst.msk [vmem:[%s278] sm:$0xff] %vm319, %v2102
      %2135 = vst.msk [vmem:[%s278 + $0x8] sm:$0xff] %vm319, %v2103
      %2136 = vst.msk [vmem:[%s278 + $0x10] sm:$0xff] %vm319, %v2104
      %2137 = vst.msk [vmem:[%s278 + $0x18] sm:$0xff] %vm319, %v2105
      %2138 = vst.msk [vmem:[%s278 + $0x20] sm:$0xff] %vm319, %v2106
      %2139 = vst.msk [vmem:[%s278 + $0x28] sm:$0xff] %vm319, %v2107
      %2140 = vst.msk [vmem:[%s278 + $0x30] sm:$0xff] %vm319, %v2108
      %2141 = vst.msk [vmem:[%s278 + $0x38] sm:$0xff] %vm319, %v2109
      %2142 = vst.msk [vmem:[%s278 + $0x40] sm:$0xff] %vm319, %v2110
      %2143 = vst.msk [vmem:[%s278 + $0x48] sm:$0xff] %vm319, %v2111
      %2144 = vst.msk [vmem:[%s278 + $0x50] sm:$0xff] %vm319, %v2112
      %2145 = vst.msk [vmem:[%s278 + $0x58] sm:$0xff] %vm319, %v2113
      %2146 = vst.msk [vmem:[%s278 + $0x60] sm:$0xff] %vm319, %v2114
      %2147 = vst.msk [vmem:[%s278 + $0x68] sm:$0xff] %vm319, %v2115
      %2148 = vst.msk [vmem:[%s278 + $0x70] sm:$0xff] %vm319, %v2116
      %2149 = vst.msk [vmem:[%s278 + $0x78] sm:$0xff] %vm319, %v2117
      %2150 = vst.msk [vmem:[%s278 + $0x80] sm:$0xff] %vm319, %v2118
      %2151 = vst.msk [vmem:[%s278 + $0x88] sm:$0xff] %vm319, %v2119
      %2152 = vst.msk [vmem:[%s278 + $0x90] sm:$0xff] %vm319, %v2120
      %2153 = vst.msk [vmem:[%s278 + $0x98] sm:$0xff] %vm319, %v2121
      %2154 = vst.msk [vmem:[%s278 + $0xa0] sm:$0xff] %vm319, %v2122
      %2155 = vst.msk [vmem:[%s278 + $0xa8] sm:$0xff] %vm319, %v2123
      %2156 = vst.msk [vmem:[%s278 + $0xb0] sm:$0xff] %vm319, %v2124
      %2157 = vst.msk [vmem:[%s278 + $0xb8] sm:$0xff] %vm319, %v2125
      %2158 = vst.msk [vmem:[%s278 + $0xc0] sm:$0xff] %vm319, %v2126
      %2159 = vst.msk [vmem:[%s278 + $0xc8] sm:$0xff] %vm319, %v2127
      %2160 = vst.msk [vmem:[%s278 + $0xd0] sm:$0xff] %vm319, %v2128
      %2161 = vst.msk [vmem:[%s278 + $0xd8] sm:$0xff] %vm319, %v2129
      %2162 = vst.msk [vmem:[%s278 + $0xe0] sm:$0xff] %vm319, %v2130
      %2163 = vst.msk [vmem:[%s278 + $0xe8] sm:$0xff] %vm319, %v2131
      %2164 = vst.msk [vmem:[%s278 + $0xf0] sm:$0xff] %vm319, %v2132
      %2165 = vst.msk [vmem:[%s278 + $0xf8] sm:$0xff] %vm319, %v2133
      %p2166 = scmp.lt.s32.totalorder %s18, 1
      %s2167 = scalar_select %p2166, %s18, 1
      %s2168 = smul.addr %s2167, 32
      %s2169 = smul.addr %s2168, 8
      %s2170 = scalar_lea.vmem %s7, %s2169
      // Predicated region
      $region49: #{tpu_custom_call.1} parent=47 // pred_check
        %p2171 = pneg %p188
      $region50: #{tpu_custom_call.1} parent=47 // pred_check_branch
        %2173 = sbr.rel (%p2171) target = $region52
      $region51: #{tpu_custom_call.1} parent=47 // pred_region
        _
      $region52: #{tpu_custom_call.1} parent=47 // pred_fallthru
        _
    $region48: #{tpu_custom_call.1} parent=5 // pred_fallthru
      _
    %p2174 = scmp.le.s32.totalorder 2, %s13
    // Predicated region
    $region53: #{tpu_custom_call.1} parent=5 // pred_check
      %p2175 = pneg %p2174
    $region54: #{tpu_custom_call.1} parent=5 // pred_check_branch
      %2177 = sbr.rel (%p2175) target = $region56
    $region55: #{tpu_custom_call.1} parent=5 // pred_region
      %s2178 = ssub.s32 %s13, 2
      // Predicated region
      $region57: #{tpu_custom_call.1} parent=55 // pred_check
        %p2179 = pneg %p194
      $region58: #{tpu_custom_call.1} parent=55 // pred_check_branch
        %2181 = sbr.rel (%p2179) target = $region60
      $region59: #{tpu_custom_call.1} parent=55 // pred_region
        %p2182 = scmp.lt.s32.totalorder %s19, 1
        %s2183 = scalar_select %p2182, %s19, 1
        %s2184 = smul.addr %s2183, 32
        %s2185 = smul.addr %s2184, 8
        %s2186 = scalar_lea.vmem %s7, %s2185
      $region60: #{tpu_custom_call.1} parent=55 // pred_fallthru
        _
    $region56: #{tpu_custom_call.1} parent=5 // pred_fallthru
      _
  $region6: #{tpu_custom_call.1} parent=0 // loop_footer
    %s17 = sadd.s32 1, %s13
  $region7: #{tpu_custom_call.1} parent=0 // loop_footer_branch
    %12 = sbr.rel target = $region3
  $region8: #{tpu_custom_call.1} parent=0 // loop_exit
    _

</llo_original>
